<compile_context>
chip_gen: v5e
topology: v5e:2x2
jax: 0.10.0
libtpu: 0.0.40
codegen_flags: <defaults>
</compile_context>

<pallas_src>
import functools

import numpy as np
import jax
import jax.numpy as jnp
from jax.experimental import pallas as pl
from jax.experimental.pallas import tpu as pltpu


def _round_up(n, m):
    return ((n + m - 1) // m) * m


# ----------------------------------------------------------------------------
# Fused Pallas kernel: [im2col-matmul -> BN -> ReLU] -> [im2col-matmul -> BN -> ReLU]
# One batch element per grid step; intermediate stays in VMEM.
# ----------------------------------------------------------------------------
def _double_conv_kernel(a1_ref, w1_ref, s1_ref, b1_ref, w2_ref, s2_ref, b2_ref,
                        o_ref, *, H, W):
    Cp = w1_ref.shape[-1]            # mid channels, padded to a multiple of 128

    # ---- conv1: one im2col matmul (M=H*W, K=9*Cin padded), f32 accumulate ---
    acc1 = jnp.dot(a1_ref[0], w1_ref[...],
                   preferred_element_type=jnp.float32)          # (H*W, Cp)

    # folded BatchNorm (eval mode) + ReLU, in f32; padded channels stay 0.
    h1 = jnp.maximum(acc1 * s1_ref[...] + b1_ref[...], 0.0)

    # ---- build the zero-halo padded intermediate as a VALUE (no scratch) ----
    h1_3d = h1.astype(jnp.bfloat16).reshape(H, W, Cp)
    zrow = jnp.zeros((1, W, Cp), jnp.bfloat16)
    zcol = jnp.zeros((H + 2, 1, Cp), jnp.bfloat16)
    h1p = jnp.concatenate([zrow, h1_3d, zrow], axis=0)          # (H+2, W,   Cp)
    h1p = jnp.concatenate([zcol, h1p, zcol], axis=1)            # (H+2, W+2, Cp)

    # ---- conv2: single im2col matmul, K = 9*Cp (lane-aligned 128 blocks) ----
    taps = [h1p[dy:dy + H, dx:dx + W, :].reshape(H * W, Cp)
            for dy in range(3) for dx in range(3)]
    a2 = jnp.concatenate(taps, axis=-1)                         # (H*W, 9*Cp)
    acc2 = jnp.dot(a2, w2_ref[...],
                   preferred_element_type=jnp.float32)          # (H*W, Coutp)

    y = jnp.maximum(acc2 * s2_ref[...] + b2_ref[...], 0.0)
    o_ref[0] = y.astype(o_ref.dtype)                            # lane-dense store


# ----------------------------------------------------------------------------
# Wrapper
# ----------------------------------------------------------------------------
def _conv1_im2col(x_nchw, k1p):
    """NCHW f32 -> (B, H*W, k1p) bf16 im2col patches for the 3x3/pad=1 conv."""
    B, Cin, H, W = x_nchw.shape
    x = jnp.transpose(x_nchw, (0, 2, 3, 1))                     # NHWC
    xp = jnp.pad(x, ((0, 0), (1, 1), (1, 1), (0, 0)))           # (B, H+2, W+2, Cin)
    taps = [xp[:, dy:dy + H, dx:dx + W, :]
            for dy in range(3) for dx in range(3)]
    a1 = jnp.concatenate(taps, axis=-1).reshape(B, H * W, 9 * Cin)
    if k1p > 9 * Cin:
        a1 = jnp.pad(a1, ((0, 0), (0, 0), (0, k1p - 9 * Cin)))
    return a1.astype(jnp.bfloat16)


def double_conv_pallas(x_nchw, kparams, out_channels):
    """Fused DoubleConv forward. x_nchw: (B, Cin, H, W) f32 -> (B, Cout, H, W) f32."""
    B, Cin, H, W = x_nchw.shape
    w1, s1, b1 = kparams["w1"], kparams["s1"], kparams["b1"]
    w2, s2, b2 = kparams["w2"], kparams["s2"], kparams["b2"]

    K1p, Cmid_p = w1.shape            # (K padded, mid channels padded)
    K2, Cout_p = w2.shape
    assert K2 == 9 * Cmid_p and 9 * Cin <= K1p and out_channels <= Cout_p

    a1 = _conv1_im2col(x_nchw, K1p)   # (B, H*W, K1p) bf16

    kernel = functools.partial(_double_conv_kernel, H=H, W=W)

    out = pl.pallas_call(
        kernel,
        out_shape=jax.ShapeDtypeStruct((B, H * W, Cout_p), jnp.float32),
        grid_spec=pltpu.PrefetchScalarGridSpec(
            num_scalar_prefetch=0,
            grid=(B,),
            in_specs=[
                pl.BlockSpec((1, H * W, K1p), lambda b: (b, 0, 0)),
                pl.BlockSpec((K1p, Cmid_p), lambda b: (0, 0)),
                pl.BlockSpec((1, Cmid_p), lambda b: (0, 0)),
                pl.BlockSpec((1, Cmid_p), lambda b: (0, 0)),
                pl.BlockSpec((9 * Cmid_p, Cout_p), lambda b: (0, 0)),
                pl.BlockSpec((1, Cout_p), lambda b: (0, 0)),
                pl.BlockSpec((1, Cout_p), lambda b: (0, 0)),
            ],
            out_specs=pl.BlockSpec((1, H * W, Cout_p), lambda b: (b, 0, 0)),
        ),
        compiler_params=pltpu.CompilerParams(
            dimension_semantics=("parallel",)),
    )(a1, w1, s1, b1, w2, s2, b2)

    out = out[..., :out_channels].reshape(B, H, W, out_channels)
    return jnp.transpose(out, (0, 3, 1, 2))   # back to NCHW


# ----------------------------------------------------------------------------
# Parameters (deterministic, synthetic; eval-mode BN folded to scale/bias)
# ----------------------------------------------------------------------------
def init_double_conv_params(key, cin, cout, cmid=None):
    cmid = cmid if cmid is not None else cout
    eps = 1e-5
    keys = iter(jax.random.split(key, 16))

    def conv_w(ci, co):
        return jax.random.normal(next(keys), (3, 3, ci, co), jnp.float32) * np.sqrt(2.0 / (9 * ci))

    def bn_fold(c):
        k1, k2, k3, k4 = jax.random.split(next(keys), 4)
        gamma = 1.0 + 0.1 * jax.random.normal(k1, (c,), jnp.float32)
        beta = 0.1 * jax.random.normal(k2, (c,), jnp.float32)
        run_mean = 0.1 * jax.random.normal(k3, (c,), jnp.float32)
        run_var = 1.0 + 0.1 * jax.random.uniform(k4, (c,), jnp.float32)
        scale = gamma / jnp.sqrt(run_var + eps)
        bias = beta - run_mean * scale
        return scale, bias

    w1 = conv_w(cin, cmid)
    s1, b1 = bn_fold(cmid)
    w2 = conv_w(cmid, cout)
    s2, b2 = bn_fold(cout)
    # canonical (f32, HWIO) params — reference path uses these directly
    return dict(w1=w1, s1=s1, b1=b1, w2=w2, s2=s2, b2=b2)


def prepare_kernel_params(p):
    """One-time prep: weights flattened to im2col form, channel dims zero-padded
    to multiples of 128 lanes, weights cast to bf16; BN scale/bias stay f32."""
    cin, cmid = p["w1"].shape[2], p["w1"].shape[3]
    cout = p["w2"].shape[3]
    k1, k1p = 9 * cin, _round_up(9 * cin, 128)
    cmid_p, cout_p = _round_up(cmid, 128), _round_up(cout, 128)

    w1 = p["w1"].reshape(k1, cmid)
    w1 = jnp.pad(w1, ((0, k1p - k1), (0, cmid_p - cmid))).astype(jnp.bfloat16)

    w2 = jnp.pad(p["w2"], ((0, 0), (0, 0), (0, cmid_p - cmid), (0, cout_p - cout)))
    w2 = w2.reshape(9 * cmid_p, cout_p).astype(jnp.bfloat16)

    def pad_vec(v, cp):
        return jnp.pad(v, (0, cp - v.shape[0])).reshape(1, -1)

    return dict(
        w1=w1, s1=pad_vec(p["s1"], cmid_p), b1=pad_vec(p["b1"], cmid_p),
        w2=w2, s2=pad_vec(p["s2"], cout_p), b2=pad_vec(p["b2"], cout_p),
    )


# ----------------------------------------------------------------------------
# Pure-JAX reference (f32) for correctness checking
# ----------------------------------------------------------------------------
def double_conv_reference(x_nchw, p):
    x = jnp.transpose(x_nchw, (0, 2, 3, 1))  # NHWC

    def conv_bn_relu(x, w_hwio, s, b):
        y = jax.lax.conv_general_dilated(
            x, w_hwio, window_strides=(1, 1), padding=((1, 1), (1, 1)),
            dimension_numbers=("NHWC", "HWIO", "NHWC"))
        return jnp.maximum(y * s + b, 0.0)

    y = conv_bn_relu(x, p["w1"], p["s1"], p["b1"])
    y = conv_bn_relu(y, p["w2"], p["s2"], p["b2"])
    return jnp.transpose(y, (0, 3, 1, 2))


if __name__ == "__main__":
    # Small shapes: batch=2, in_channels=4, 16x16 spatial, mid/out channels=64
    # (typical UNet stem DoubleConv(in_channels, 64)).
    B, CIN, H, W = 2, 4, 16, 16
    CMID, COUT = 64, 64

    key = jax.random.PRNGKey(0)
    kp, kx = jax.random.split(key)

    ref_params = init_double_conv_params(kp, CIN, COUT, CMID)
    kparams = prepare_kernel_params(ref_params)
    x = jax.random.normal(kx, (B, CIN, H, W), jnp.float32)

    fwd = jax.jit(double_conv_pallas, static_argnames=("out_channels",))
    out = jax.block_until_ready(fwd(x, kparams, out_channels=COUT))

    assert out.shape == (B, COUT, H, W), out.shape
    assert bool(jnp.all(jnp.isfinite(out)))
    assert bool(jnp.all(out >= 0.0))  # ReLU output range

    ref = double_conv_reference(x, ref_params)
    max_err = float(jnp.max(jnp.abs(out - ref)))
    assert max_err < 0.3, f"max abs err vs f32 reference: {max_err}"  # bf16 MXU operands

    print("KERNEL_OK")
</pallas_src>

<mosaic_0001>
module attributes {stable_mosaic.version = 11 : i64} {
  func.func @_double_conv_kernel(%arg0: i32, %arg1: memref<1x256x128xbf16, #tpu.memory_space<vmem>>, %arg2: memref<128x128xbf16, #tpu.memory_space<vmem>>, %arg3: memref<1x128xf32, #tpu.memory_space<vmem>>, %arg4: memref<1x128xf32, #tpu.memory_space<vmem>>, %arg5: memref<1152x128xbf16, #tpu.memory_space<vmem>>, %arg6: memref<1x128xf32, #tpu.memory_space<vmem>>, %arg7: memref<1x128xf32, #tpu.memory_space<vmem>>, %arg8: memref<1x256x128xf32, #tpu.memory_space<vmem>>) attributes {dimension_semantics = [#tpu.dimension_semantics<parallel>], iteration_bounds = array<i64: 2>, scalar_prefetch = 0 : i64, scratch_operands = 0 : i64, tpu.core_type = #tpu.core_type<tc>, window_params = [{transform_indices = @transform_0, window_bounds = array<i64: 1, 256, 128>}, {pipeline_mode = #tpu.pipeline_mode<synchronous>, transform_indices = @transform_1, window_bounds = array<i64: 128, 128>}, {pipeline_mode = #tpu.pipeline_mode<synchronous>, transform_indices = @transform_2, window_bounds = array<i64: 1, 128>}, {pipeline_mode = #tpu.pipeline_mode<synchronous>, transform_indices = @transform_3, window_bounds = array<i64: 1, 128>}, {pipeline_mode = #tpu.pipeline_mode<synchronous>, transform_indices = @transform_4, window_bounds = array<i64: 1152, 128>}, {pipeline_mode = #tpu.pipeline_mode<synchronous>, transform_indices = @transform_5, window_bounds = array<i64: 1, 128>}, {pipeline_mode = #tpu.pipeline_mode<synchronous>, transform_indices = @transform_6, window_bounds = array<i64: 1, 128>}, {transform_indices = @transform_7, window_bounds = array<i64: 1, 256, 128>}]} {
    %c0 = arith.constant 0 : index
    %c0_0 = arith.constant 0 : index
    %c0_1 = arith.constant 0 : index
    %0 = vector.load %arg1[%c0, %c0_0, %c0_1] : memref<1x256x128xbf16, #tpu.memory_space<vmem>>, vector<1x256x128xbf16>
    %1 = vector.shape_cast %0 : vector<1x256x128xbf16> to vector<256x128xbf16>
    %c0_2 = arith.constant 0 : index
    %c0_3 = arith.constant 0 : index
    %2 = vector.load %arg2[%c0_2, %c0_3] : memref<128x128xbf16, #tpu.memory_space<vmem>>, vector<128x128xbf16>
    %cst = arith.constant dense<0.000000e+00> : vector<256x128xf32>
    %3 = tpu.matmul %1, %2, %cst {dimension_numbers = #tpu.dot_dimension_numbers<[1], [0], [0], [1], [0, 0, 1, 1], [], []>} : vector<256x128xbf16>, vector<128x128xbf16>, vector<256x128xf32> -> vector<256x128xf32>
    %c0_4 = arith.constant 0 : index
    %c0_5 = arith.constant 0 : index
    %4 = vector.load %arg3[%c0_4, %c0_5] : memref<1x128xf32, #tpu.memory_space<vmem>>, vector<1x128xf32>
    %5 = vector.broadcast %4 : vector<1x128xf32> to vector<256x128xf32>
    %6 = arith.mulf %3, %5 : vector<256x128xf32>
    %c0_6 = arith.constant 0 : index
    %c0_7 = arith.constant 0 : index
    %7 = vector.load %arg4[%c0_6, %c0_7] : memref<1x128xf32, #tpu.memory_space<vmem>>, vector<1x128xf32>
    %8 = vector.broadcast %7 : vector<1x128xf32> to vector<256x128xf32>
    %9 = arith.addf %6, %8 : vector<256x128xf32>
    %cst_8 = arith.constant 0.000000e+00 : f32
    %10 = vector.broadcast %cst_8 : f32 to vector<256x128xf32>
    %11 = arith.maximumf %9, %10 : vector<256x128xf32>
    %12 = arith.truncf %11 : vector<256x128xf32> to vector<256x128xbf16>
    %13 = vector.shape_cast %12 : vector<256x128xbf16> to vector<16x16x128xbf16>
    %cst_9 = arith.constant 0.000000e+00 : bf16
    %14 = vector.broadcast %cst_9 : bf16 to vector<1x16x128xbf16>
    %cst_10 = arith.constant 0.000000e+00 : bf16
    %15 = vector.broadcast %cst_10 : bf16 to vector<18x1x128xbf16>
    %16 = tpu.concatenate %14, %13, %14 in 0 : vector<1x16x128xbf16>, vector<16x16x128xbf16>, vector<1x16x128xbf16> -> vector<18x16x128xbf16>
    %17 = tpu.concatenate %15, %16, %15 in 1 : vector<18x1x128xbf16>, vector<18x16x128xbf16>, vector<18x1x128xbf16> -> vector<18x18x128xbf16>
    %18 = vector.extract_strided_slice %17 {offsets = [0, 0, 0], sizes = [16, 16, 128], strides = [1, 1, 1]} : vector<18x18x128xbf16> to vector<16x16x128xbf16>
    %19 = vector.shape_cast %18 : vector<16x16x128xbf16> to vector<256x128xbf16>
    %20 = vector.extract_strided_slice %17 {offsets = [0, 1, 0], sizes = [16, 16, 128], strides = [1, 1, 1]} : vector<18x18x128xbf16> to vector<16x16x128xbf16>
    %21 = vector.shape_cast %20 : vector<16x16x128xbf16> to vector<256x128xbf16>
    %22 = vector.extract_strided_slice %17 {offsets = [0, 2, 0], sizes = [16, 16, 128], strides = [1, 1, 1]} : vector<18x18x128xbf16> to vector<16x16x128xbf16>
    %23 = vector.shape_cast %22 : vector<16x16x128xbf16> to vector<256x128xbf16>
    %24 = vector.extract_strided_slice %17 {offsets = [1, 0, 0], sizes = [16, 16, 128], strides = [1, 1, 1]} : vector<18x18x128xbf16> to vector<16x16x128xbf16>
    %25 = vector.shape_cast %24 : vector<16x16x128xbf16> to vector<256x128xbf16>
    %26 = vector.extract_strided_slice %17 {offsets = [1, 1, 0], sizes = [16, 16, 128], strides = [1, 1, 1]} : vector<18x18x128xbf16> to vector<16x16x128xbf16>
    %27 = vector.shape_cast %26 : vector<16x16x128xbf16> to vector<256x128xbf16>
    %28 = vector.extract_strided_slice %17 {offsets = [1, 2, 0], sizes = [16, 16, 128], strides = [1, 1, 1]} : vector<18x18x128xbf16> to vector<16x16x128xbf16>
    %29 = vector.shape_cast %28 : vector<16x16x128xbf16> to vector<256x128xbf16>
    %30 = vector.extract_strided_slice %17 {offsets = [2, 0, 0], sizes = [16, 16, 128], strides = [1, 1, 1]} : vector<18x18x128xbf16> to vector<16x16x128xbf16>
    %31 = vector.shape_cast %30 : vector<16x16x128xbf16> to vector<256x128xbf16>
    %32 = vector.extract_strided_slice %17 {offsets = [2, 1, 0], sizes = [16, 16, 128], strides = [1, 1, 1]} : vector<18x18x128xbf16> to vector<16x16x128xbf16>
    %33 = vector.shape_cast %32 : vector<16x16x128xbf16> to vector<256x128xbf16>
    %34 = vector.extract_strided_slice %17 {offsets = [2, 2, 0], sizes = [16, 16, 128], strides = [1, 1, 1]} : vector<18x18x128xbf16> to vector<16x16x128xbf16>
    %35 = vector.shape_cast %34 : vector<16x16x128xbf16> to vector<256x128xbf16>
    %36 = tpu.concatenate %19, %21, %23, %25, %27, %29, %31, %33, %35 in 1 : vector<256x128xbf16>, vector<256x128xbf16>, vector<256x128xbf16>, vector<256x128xbf16>, vector<256x128xbf16>, vector<256x128xbf16>, vector<256x128xbf16>, vector<256x128xbf16>, vector<256x128xbf16> -> vector<256x1152xbf16>
    %c0_11 = arith.constant 0 : index
    %c0_12 = arith.constant 0 : index
    %37 = vector.load %arg5[%c0_11, %c0_12] : memref<1152x128xbf16, #tpu.memory_space<vmem>>, vector<1152x128xbf16>
    %cst_13 = arith.constant dense<0.000000e+00> : vector<256x128xf32>
    %38 = tpu.matmul %36, %37, %cst_13 {dimension_numbers = #tpu.dot_dimension_numbers<[1], [0], [0], [1], [0, 0, 1, 1], [], []>} : vector<256x1152xbf16>, vector<1152x128xbf16>, vector<256x128xf32> -> vector<256x128xf32>
    %c0_14 = arith.constant 0 : index
    %c0_15 = arith.constant 0 : index
    %39 = vector.load %arg6[%c0_14, %c0_15] : memref<1x128xf32, #tpu.memory_space<vmem>>, vector<1x128xf32>
    %40 = vector.broadcast %39 : vector<1x128xf32> to vector<256x128xf32>
    %41 = arith.mulf %38, %40 : vector<256x128xf32>
    %c0_16 = arith.constant 0 : index
    %c0_17 = arith.constant 0 : index
    %42 = vector.load %arg7[%c0_16, %c0_17] : memref<1x128xf32, #tpu.memory_space<vmem>>, vector<1x128xf32>
    %43 = vector.broadcast %42 : vector<1x128xf32> to vector<256x128xf32>
    %44 = arith.addf %41, %43 : vector<256x128xf32>
    %cst_18 = arith.constant 0.000000e+00 : f32
    %45 = vector.broadcast %cst_18 : f32 to vector<256x128xf32>
    %46 = arith.maximumf %44, %45 : vector<256x128xf32>
    %c0_19 = arith.constant 0 : index
    %c0_20 = arith.constant 0 : index
    %c0_21 = arith.constant 0 : index
    %47 = vector.load %arg8[%c0_19, %c0_20, %c0_21] : memref<1x256x128xf32, #tpu.memory_space<vmem>>, vector<1x256x128xf32>
    %48 = vector.shape_cast %47 : vector<1x256x128xf32> to vector<256x128xf32>
    %49 = vector.shape_cast %46 : vector<256x128xf32> to vector<1x256x128xf32>
    tpu.vector_store %arg8[%c0_19, %c0_20, %c0_21], %49 {strides = array<i32>} : memref<1x256x128xf32, #tpu.memory_space<vmem>>, vector<1x256x128xf32>,
    return
  }
  func.func @transform_0(%arg0: i32) -> (i32, i32, i32) {
    %c0_i32 = arith.constant 0 : i32
    %c0_i32_0 = arith.constant 0 : i32
    %c0_i32_1 = arith.constant 0 : i32
    return %arg0, %c0_i32, %c0_i32_0 : i32, i32, i32
  }
  func.func @transform_1(%arg0: i32) -> (i32, i32) {
    %c0_i32 = arith.constant 0 : i32
    %c0_i32_0 = arith.constant 0 : i32
    %c0_i32_1 = arith.constant 0 : i32
    return %c0_i32, %c0_i32_0 : i32, i32
  }
  func.func @transform_2(%arg0: i32) -> (i32, i32) {
    %c0_i32 = arith.constant 0 : i32
    %c0_i32_0 = arith.constant 0 : i32
    %c0_i32_1 = arith.constant 0 : i32
    return %c0_i32, %c0_i32_0 : i32, i32
  }
  func.func @transform_3(%arg0: i32) -> (i32, i32) {
    %c0_i32 = arith.constant 0 : i32
    %c0_i32_0 = arith.constant 0 : i32
    %c0_i32_1 = arith.constant 0 : i32
    return %c0_i32, %c0_i32_0 : i32, i32
  }
  func.func @transform_4(%arg0: i32) -> (i32, i32) {
    %c0_i32 = arith.constant 0 : i32
    %c0_i32_0 = arith.constant 0 : i32
    %c0_i32_1 = arith.constant 0 : i32
    return %c0_i32, %c0_i32_0 : i32, i32
  }
  func.func @transform_5(%arg0: i32) -> (i32, i32) {
    %c0_i32 = arith.constant 0 : i32
    %c0_i32_0 = arith.constant 0 : i32
    %c0_i32_1 = arith.constant 0 : i32
    return %c0_i32, %c0_i32_0 : i32, i32
  }
  func.func @transform_6(%arg0: i32) -> (i32, i32) {
    %c0_i32 = arith.constant 0 : i32
    %c0_i32_0 = arith.constant 0 : i32
    %c0_i32_1 = arith.constant 0 : i32
    return %c0_i32, %c0_i32_0 : i32, i32
  }
  func.func @transform_7(%arg0: i32) -> (i32, i32, i32) {
    %c0_i32 = arith.constant 0 : i32
    %c0_i32_0 = arith.constant 0 : i32
    %c0_i32_1 = arith.constant 0 : i32
    return %arg0, %c0_i32, %c0_i32_0 : i32, i32, i32
  }
}

</mosaic_0001>

<llo_original>
// kernel: double_conv_pallas.1
$region0: #{double_conv_pallas.1}
  #allocation0 [shape = 'u32[]', space=smem, size = 0x4, offset = 0x4, fixed_abs, tag = 'smem constant byte address 0x4 - core index']
  #allocation1 [shape = 'u32[72,128]{1,0:T(1,128)}', space=vmem, size = 0x9000, scoped, tag = 'internal scratch']
  %s0 = inlined_call_operand.vmem [shape: bf16[2,256,128], index: 0, kind: input, shape index: {}]
  %s1 = inlined_call_operand.vmem [shape: bf16[128,128], index: 1, kind: input, shape index: {}]
  %s2 = inlined_call_operand.vmem [shape: f32[1,128], index: 2, kind: input, shape index: {}]
  %s3 = inlined_call_operand.vmem [shape: f32[1,128], index: 3, kind: input, shape index: {}]
  %s4 = inlined_call_operand.vmem [shape: bf16[1152,128], index: 4, kind: input, shape index: {}]
  %s5 = inlined_call_operand.vmem [shape: f32[1,128], index: 5, kind: input, shape index: {}]
  %s6 = inlined_call_operand.vmem [shape: f32[1,128], index: 6, kind: input, shape index: {}]
  %s7 = inlined_call_operand.hbm [shape: f32[2,256,128], index: 7, kind: output, shape index: {}]
  %s8 = sld [smem:[#allocation0]]
  $region61: #{double_conv_pallas.1} parent=0
    _
  %s10 = ssub.s32 1, %s8
  %s11 = scalar_select 0, %s10, %s8
  $region1: #{double_conv_pallas.1} parent=0
    #allocation2 [shape = 'u8[262144]{0}', space=vmem, size = 0x40000, scoped, tag = 'output window, operand 0']
    #allocation3 [shape = 's32[2]{0}', space=sflag, size = 0x8, scoped, tag = 'scoped memory for double_conv_pallas.1']
    %12 = vsyncpa [#allocation3], 0
    %s13 = scalar_lea.sflag [#allocation3], 1
    %14 = vsyncpa %s13, 0
    loop: start=0, step=1, limit=4
    $region2: #{double_conv_pallas.1} parent=1 // loop_pre_header
      _
    $region3: #{double_conv_pallas.1} parent=1 // loop_header
      %s16 = sphi 0, %s20
      %p17 = scmp.ge.s32.totalorder %s16, 4
      %s26 = sphi 0, %s28
      %s29 = sphi 0, %s26
      %s30 = sphi 0, %s29
      %s46 = sphi 0, %s30
      %s50 = sphi 0, %s50
      %s52 = sphi 0, %s50
      %s53 = sphi 0, %s52
      %s67 = sphi 0, %s53
      %s71 = sphi 0, %s71
      %s73 = sphi 0, %s71
      %s74 = sphi 0, %s73
      %s88 = sphi 0, %s74
      %s92 = sphi 0, %s92
      %s94 = sphi 0, %s92
      %s95 = sphi 0, %s94
      %s109 = sphi 0, %s95
      %s113 = sphi 0, %s113
      %s115 = sphi 0, %s113
      %s116 = sphi 0, %s115
      %s130 = sphi 0, %s116
      %s134 = sphi 0, %s134
      %s136 = sphi 0, %s134
      %s137 = sphi 0, %s136
      %s151 = sphi 0, %s137
      %s155 = sphi 0, %s155
      %s157 = sphi 0, %s155
      %s158 = sphi 0, %s157
      %s172 = sphi 0, %s158
      %s178 = sphi 0, %s180
      %s181 = sphi 0, %s178
      %s182 = sphi 0, %s181
      %s198 = sphi 0, %s182
    $region4: #{double_conv_pallas.1} parent=1 // loop_header_branch
      %19 = sbr.rel (%p17) target = $region8
    $region5: #{double_conv_pallas.1} parent=1 // loop_body
      %s21 = ssub.s32 %s16, 1
      %s22 = ssub.s32 %s16, 2
      %s23 = sadd.s32 %s16, 1
      %s24 = ssub.s32 %s16, %s23
      %p25 = scmp.eq.s32.totalorder %s24, 0
      %s27 = sadd.s32 %s26, 1
      %s28 = scalar_select %p25, %s26, %s27
      %p31 = pneg %p25
      %p32 = scmp.eq.s32.totalorder %s16, 1
      %p33 = por %p31, %p32
      %p34 = scmp.ne.s32.totalorder %s26, %s29
      %p35 = scmp.eq.s32.totalorder %s16, 0
      %p36 = por %p34, %p35
      %p37 = scmp.ne.s32.totalorder %s26, %s29
      %p38 = scmp.eq.s32.totalorder %s21, 1
      %p39 = por %p37, %p38
      %p40 = scmp.ne.s32.totalorder %s29, %s30
      %p41 = scmp.eq.s32.totalorder %s21, 0
      %p42 = por %p40, %p41
      %p43 = scmp.ne.s32.totalorder %s29, %s30
      %p44 = scmp.eq.s32.totalorder %s22, 1
      %p45 = por %p43, %p44
      %p47 = scmp.ne.s32.totalorder %s30, %s46
      %p48 = scmp.eq.s32.totalorder %s22, 0
      %p49 = por %p47, %p48
      %s51 = sadd.s32 %s50, 1
      %p54 = scmp.eq.s32.totalorder %s16, 1
      %p55 = scmp.ne.s32.totalorder %s50, %s52
      %p56 = scmp.eq.s32.totalorder %s16, 0
      %p57 = por %p55, %p56
      %p58 = scmp.ne.s32.totalorder %s50, %s52
      %p59 = scmp.eq.s32.totalorder %s21, 1
      %p60 = por %p58, %p59
      %p61 = scmp.ne.s32.totalorder %s52, %s53
      %p62 = scmp.eq.s32.totalorder %s21, 0
      %p63 = por %p61, %p62
      %p64 = scmp.ne.s32.totalorder %s52, %s53
      %p65 = scmp.eq.s32.totalorder %s22, 1
      %p66 = por %p64, %p65
      %p68 = scmp.ne.s32.totalorder %s53, %s67
      %p69 = scmp.eq.s32.totalorder %s22, 0
      %p70 = por %p68, %p69
      %s72 = sadd.s32 %s71, 1
      %p75 = scmp.eq.s32.totalorder %s16, 1
      %p76 = scmp.ne.s32.totalorder %s71, %s73
      %p77 = scmp.eq.s32.totalorder %s16, 0
      %p78 = por %p76, %p77
      %p79 = scmp.ne.s32.totalorder %s71, %s73
      %p80 = scmp.eq.s32.totalorder %s21, 1
      %p81 = por %p79, %p80
      %p82 = scmp.ne.s32.totalorder %s73, %s74
      %p83 = scmp.eq.s32.totalorder %s21, 0
      %p84 = por %p82, %p83
      %p85 = scmp.ne.s32.totalorder %s73, %s74
      %p86 = scmp.eq.s32.totalorder %s22, 1
      %p87 = por %p85, %p86
      %p89 = scmp.ne.s32.totalorder %s74, %s88
      %p90 = scmp.eq.s32.totalorder %s22, 0
      %p91 = por %p89, %p90
      %s93 = sadd.s32 %s92, 1
      %p96 = scmp.eq.s32.totalorder %s16, 1
      %p97 = scmp.ne.s32.totalorder %s92, %s94
      %p98 = scmp.eq.s32.totalorder %s16, 0
      %p99 = por %p97, %p98
      %p100 = scmp.ne.s32.totalorder %s92, %s94
      %p101 = scmp.eq.s32.totalorder %s21, 1
      %p102 = por %p100, %p101
      %p103 = scmp.ne.s32.totalorder %s94, %s95
      %p104 = scmp.eq.s32.totalorder %s21, 0
      %p105 = por %p103, %p104
      %p106 = scmp.ne.s32.totalorder %s94, %s95
      %p107 = scmp.eq.s32.totalorder %s22, 1
      %p108 = por %p106, %p107
      %p110 = scmp.ne.s32.totalorder %s95, %s109
      %p111 = scmp.eq.s32.totalorder %s22, 0
      %p112 = por %p110, %p111
      %s114 = sadd.s32 %s113, 1
      %p117 = scmp.eq.s32.totalorder %s16, 1
      %p118 = scmp.ne.s32.totalorder %s113, %s115
      %p119 = scmp.eq.s32.totalorder %s16, 0
      %p120 = por %p118, %p119
      %p121 = scmp.ne.s32.totalorder %s113, %s115
      %p122 = scmp.eq.s32.totalorder %s21, 1
      %p123 = por %p121, %p122
      %p124 = scmp.ne.s32.totalorder %s115, %s116
      %p125 = scmp.eq.s32.totalorder %s21, 0
      %p126 = por %p124, %p125
      %p127 = scmp.ne.s32.totalorder %s115, %s116
      %p128 = scmp.eq.s32.totalorder %s22, 1
      %p129 = por %p127, %p128
      %p131 = scmp.ne.s32.totalorder %s116, %s130
      %p132 = scmp.eq.s32.totalorder %s22, 0
      %p133 = por %p131, %p132
      %s135 = sadd.s32 %s134, 1
      %p138 = scmp.eq.s32.totalorder %s16, 1
      %p139 = scmp.ne.s32.totalorder %s134, %s136
      %p140 = scmp.eq.s32.totalorder %s16, 0
      %p141 = por %p139, %p140
      %p142 = scmp.ne.s32.totalorder %s134, %s136
      %p143 = scmp.eq.s32.totalorder %s21, 1
      %p144 = por %p142, %p143
      %p145 = scmp.ne.s32.totalorder %s136, %s137
      %p146 = scmp.eq.s32.totalorder %s21, 0
      %p147 = por %p145, %p146
      %p148 = scmp.ne.s32.totalorder %s136, %s137
      %p149 = scmp.eq.s32.totalorder %s22, 1
      %p150 = por %p148, %p149
      %p152 = scmp.ne.s32.totalorder %s137, %s151
      %p153 = scmp.eq.s32.totalorder %s22, 0
      %p154 = por %p152, %p153
      %s156 = sadd.s32 %s155, 1
      %p159 = scmp.eq.s32.totalorder %s16, 1
      %p160 = scmp.ne.s32.totalorder %s155, %s157
      %p161 = scmp.eq.s32.totalorder %s16, 0
      %p162 = por %p160, %p161
      %p163 = scmp.ne.s32.totalorder %s155, %s157
      %p164 = scmp.eq.s32.totalorder %s21, 1
      %p165 = por %p163, %p164
      %p166 = scmp.ne.s32.totalorder %s157, %s158
      %p167 = scmp.eq.s32.totalorder %s21, 0
      %p168 = por %p166, %p167
      %p169 = scmp.ne.s32.totalorder %s157, %s158
      %p170 = scmp.eq.s32.totalorder %s22, 1
      %p171 = por %p169, %p170
      %p173 = scmp.ne.s32.totalorder %s158, %s172
      %p174 = scmp.eq.s32.totalorder %s22, 0
      %p175 = por %p173, %p174
      %s176 = ssub.s32 %s16, %s23
      %p177 = scmp.eq.s32.totalorder %s176, 0
      %s179 = sadd.s32 %s178, 1
      %s180 = scalar_select %p177, %s178, %s179
      %p183 = pneg %p177
      %p184 = scmp.eq.s32.totalorder %s16, 1
      %p185 = por %p183, %p184
      %p186 = scmp.ne.s32.totalorder %s178, %s181
      %p187 = scmp.eq.s32.totalorder %s16, 0
      %p188 = por %p186, %p187
      %p189 = scmp.ne.s32.totalorder %s178, %s181
      %p190 = scmp.eq.s32.totalorder %s21, 1
      %p191 = por %p189, %p190
      %p192 = scmp.ne.s32.totalorder %s181, %s182
      %p193 = scmp.eq.s32.totalorder %s21, 0
      %p194 = por %p192, %p193
      %p195 = scmp.ne.s32.totalorder %s181, %s182
      %p196 = scmp.eq.s32.totalorder %s22, 1
      %p197 = por %p195, %p196
      %p199 = scmp.ne.s32.totalorder %s182, %s198
      %p200 = scmp.eq.s32.totalorder %s22, 0
      %p201 = por %p199, %p200
      %p202 = scmp.le.s32.totalorder 1, %s16
      %p203 = scmp.lt.s32.totalorder %s16, 3
      %p204 = pnand %p202, %p203
      %p205 = pneg %p204
      // Predicated region
      $region9: #{double_conv_pallas.1} parent=5 // pred_check
        _
      $region10: #{double_conv_pallas.1} parent=5 // pred_check_branch
        %207 = sbr.rel (%p204) target = $region12
      $region11: #{double_conv_pallas.1} parent=5 // pred_region
        %s208 = ssub.s32 %s16, 1
        // Predicated region
        $region13: #{double_conv_pallas.1} parent=11 // pred_check
          %p209 = pneg %p63
        $region14: #{double_conv_pallas.1} parent=11 // pred_check_branch
          %211 = sbr.rel (%p209) target = $region16
        $region15: #{double_conv_pallas.1} parent=11 // pred_region
          _
        $region16: #{double_conv_pallas.1} parent=11 // pred_fallthru
          _
        // Predicated region
        $region17: #{double_conv_pallas.1} parent=11 // pred_check
          %p212 = pneg %p84
        $region18: #{double_conv_pallas.1} parent=11 // pred_check_branch
          %214 = sbr.rel (%p212) target = $region20
        $region19: #{double_conv_pallas.1} parent=11 // pred_region
          _
        $region20: #{double_conv_pallas.1} parent=11 // pred_fallthru
          _
        // Predicated region
        $region21: #{double_conv_pallas.1} parent=11 // pred_check
          %p215 = pneg %p105
        $region22: #{double_conv_pallas.1} parent=11 // pred_check_branch
          %217 = sbr.rel (%p215) target = $region24
        $region23: #{double_conv_pallas.1} parent=11 // pred_region
          _
        $region24: #{double_conv_pallas.1} parent=11 // pred_fallthru
          _
        // Predicated region
        $region25: #{double_conv_pallas.1} parent=11 // pred_check
          %p218 = pneg %p126
        $region26: #{double_conv_pallas.1} parent=11 // pred_check_branch
          %220 = sbr.rel (%p218) target = $region28
        $region27: #{double_conv_pallas.1} parent=11 // pred_region
          _
        $region28: #{double_conv_pallas.1} parent=11 // pred_fallthru
          _
        // Predicated region
        $region29: #{double_conv_pallas.1} parent=11 // pred_check
          %p221 = pneg %p147
        $region30: #{double_conv_pallas.1} parent=11 // pred_check_branch
          %223 = sbr.rel (%p221) target = $region32
        $region31: #{double_conv_pallas.1} parent=11 // pred_region
          _
        $region32: #{double_conv_pallas.1} parent=11 // pred_fallthru
          _
        // Predicated region
        $region33: #{double_conv_pallas.1} parent=11 // pred_check
          %p224 = pneg %p168
        $region34: #{double_conv_pallas.1} parent=11 // pred_check_branch
          %226 = sbr.rel (%p224) target = $region36
        $region35: #{double_conv_pallas.1} parent=11 // pred_region
          _
        $region36: #{double_conv_pallas.1} parent=11 // pred_fallthru
          _
      $region12: #{double_conv_pallas.1} parent=5 // pred_fallthru
        _
      %p227 = scmp.lt.s32.totalorder %s16, 2
      // Predicated region
      $region37: #{double_conv_pallas.1} parent=5 // pred_check
        %p228 = pneg %p227
      $region38: #{double_conv_pallas.1} parent=5 // pred_check_branch
        %230 = sbr.rel (%p228) target = $region40
      $region39: #{double_conv_pallas.1} parent=5 // pred_region
        // Predicated region
        $region41: #{double_conv_pallas.1} parent=39 // pred_check
          %p231 = pneg %p36
        $region42: #{double_conv_pallas.1} parent=39 // pred_check_branch
          %233 = sbr.rel (%p231) target = $region44
        $region43: #{double_conv_pallas.1} parent=39 // pred_region
          %p234 = scmp.lt.s32.totalorder %s16, 1
          %s235 = scalar_select %p234, %s16, 1
          %s236 = smul.addr %s235, 32
          %s237 = smul.addr %s236, 4
          %s238 = scalar_lea.vmem %s0, %s237
        $region44: #{double_conv_pallas.1} parent=39 // pred_fallthru
          _
      $region40: #{double_conv_pallas.1} parent=5 // pred_fallthru
        _
      %p239 = scmp.le.s32.totalorder 1, %s16
      %p240 = scmp.lt.s32.totalorder %s16, 3
      %p241 = pnand %p239, %p240
      %p242 = pneg %p241
      // Predicated region
      $region45: #{double_conv_pallas.1} parent=5 // pred_check
        _
      $region46: #{double_conv_pallas.1} parent=5 // pred_check_branch
        %244 = sbr.rel (%p241) target = $region48
      $region47: #{double_conv_pallas.1} parent=5 // pred_region
        %s245 = ssub.s32 %s16, 1
        %p246 = scmp.lt.s32.totalorder %s21, 1
        %s247 = scalar_select %p246, %s21, 1
        %s248 = smul.addr %s247, 32
        %s249 = smul.addr %s248, 4
        %s250 = scalar_lea.vmem %s0, %s249
        %p251 = pneg %p42
        %p252 = pneg %p39
        %p253 = pneg %p63
        %p254 = pneg %p60
        %p255 = pneg %p84
        %p256 = pneg %p81
        %p257 = pneg %p105
        %p258 = pneg %p102
        %p259 = pneg %p126
        %p260 = pneg %p123
        %p261 = pneg %p147
        %p262 = pneg %p144
        %p263 = pneg %p168
        %p264 = pneg %p165
        %p265 = pneg %p194
        %p266 = pneg %p191
        %s267 = sand.u32 %s181, 1
        %s268 = scalar_lea.sflag [#allocation3], %s267
        %s269 = sand.u32 %s181, 1
        %s270 = smul.addr %s269, 256
        %s271 = scalar_lea.vmem [#allocation2], %s270
        %p272 = scmp.lt.s32.totalorder %s21, 1
        %s273 = scalar_select %p272, %s21, 1
        %s274 = smul.addr %s273, 32
        %s275 = smul.addr %s274, 4
        %s276 = scalar_lea.vmem %s0, %s275
        %v278 = vld [vmem:[%s276] sm:$0xf]
        %v279 = vld [vmem:[%s276 + $0x4] sm:$0xf]
        %v280 = vld [vmem:[%s276 + $0x8] sm:$0xf]
        %v281 = vld [vmem:[%s276 + $0xc] sm:$0xf]
        %v282 = vld [vmem:[%s276 + $0x10] sm:$0xf]
        %v283 = vld [vmem:[%s276 + $0x14] sm:$0xf]
        %v284 = vld [vmem:[%s276 + $0x18] sm:$0xf]
        %v285 = vld [vmem:[%s276 + $0x1c] sm:$0xf]
        %v286 = vld [vmem:[%s276 + $0x20] sm:$0xf]
        %v287 = vld [vmem:[%s276 + $0x24] sm:$0xf]
        %v288 = vld [vmem:[%s276 + $0x28] sm:$0xf]
        %v289 = vld [vmem:[%s276 + $0x2c] sm:$0xf]
        %v290 = vld [vmem:[%s276 + $0x30] sm:$0xf]
        %v291 = vld [vmem:[%s276 + $0x34] sm:$0xf]
        %v292 = vld [vmem:[%s276 + $0x38] sm:$0xf]
        %v293 = vld [vmem:[%s276 + $0x3c] sm:$0xf]
        %v294 = vld [vmem:[%s276 + $0x40] sm:$0xf]
        %v295 = vld [vmem:[%s276 + $0x44] sm:$0xf]
        %v296 = vld [vmem:[%s276 + $0x48] sm:$0xf]
        %v297 = vld [vmem:[%s276 + $0x4c] sm:$0xf]
        %v298 = vld [vmem:[%s276 + $0x50] sm:$0xf]
        %v299 = vld [vmem:[%s276 + $0x54] sm:$0xf]
        %v300 = vld [vmem:[%s276 + $0x58] sm:$0xf]
        %v301 = vld [vmem:[%s276 + $0x5c] sm:$0xf]
        %v302 = vld [vmem:[%s276 + $0x60] sm:$0xf]
        %v303 = vld [vmem:[%s276 + $0x64] sm:$0xf]
        %v304 = vld [vmem:[%s276 + $0x68] sm:$0xf]
        %v305 = vld [vmem:[%s276 + $0x6c] sm:$0xf]
        %v306 = vld [vmem:[%s276 + $0x70] sm:$0xf]
        %v307 = vld [vmem:[%s276 + $0x74] sm:$0xf]
        %v308 = vld [vmem:[%s276 + $0x78] sm:$0xf]
        %v309 = vld [vmem:[%s276 + $0x7c] sm:$0xf]
        %v310 = vld [vmem:[%s1] sm:$0xf]
        %v311 = vld [vmem:[%s1 + $0x4] sm:$0xf]
        %v312 = vld [vmem:[%s1 + $0x8] sm:$0xf]
        %v313 = vld [vmem:[%s1 + $0xc] sm:$0xf]
        %v314 = vld [vmem:[%s1 + $0x10] sm:$0xf]
        %v315 = vld [vmem:[%s1 + $0x14] sm:$0xf]
        %v316 = vld [vmem:[%s1 + $0x18] sm:$0xf]
        %v317 = vld [vmem:[%s1 + $0x1c] sm:$0xf]
        %v318 = vld [vmem:[%s1 + $0x20] sm:$0xf]
        %v319 = vld [vmem:[%s1 + $0x24] sm:$0xf]
        %v320 = vld [vmem:[%s1 + $0x28] sm:$0xf]
        %v321 = vld [vmem:[%s1 + $0x2c] sm:$0xf]
        %v322 = vld [vmem:[%s1 + $0x30] sm:$0xf]
        %v323 = vld [vmem:[%s1 + $0x34] sm:$0xf]
        %v324 = vld [vmem:[%s1 + $0x38] sm:$0xf]
        %v325 = vld [vmem:[%s1 + $0x3c] sm:$0xf]
        %v358 = vunpack.c.l.b16 %v278
        %v359 = vunpack.c.l.b16 %v279
        %v360 = vunpack.c.l.b16 %v280
        %v361 = vunpack.c.l.b16 %v281
        %v362 = vunpack.c.l.b16 %v282
        %v363 = vunpack.c.l.b16 %v283
        %v364 = vunpack.c.l.b16 %v284
        %v365 = vunpack.c.l.b16 %v285
        %v366 = vunpack.c.l.b16 %v286
        %v367 = vunpack.c.l.b16 %v287
        %v368 = vunpack.c.l.b16 %v288
        %v369 = vunpack.c.l.b16 %v289
        %v370 = vunpack.c.l.b16 %v290
        %v371 = vunpack.c.l.b16 %v291
        %v372 = vunpack.c.l.b16 %v292
        %v373 = vunpack.c.l.b16 %v293
        %v374 = vunpack.c.l.b16 %v294
        %v375 = vunpack.c.l.b16 %v295
        %v376 = vunpack.c.l.b16 %v296
        %v377 = vunpack.c.l.b16 %v297
        %v378 = vunpack.c.l.b16 %v298
        %v379 = vunpack.c.l.b16 %v299
        %v380 = vunpack.c.l.b16 %v300
        %v381 = vunpack.c.l.b16 %v301
        %v382 = vunpack.c.l.b16 %v302
        %v383 = vunpack.c.l.b16 %v303
        %v384 = vunpack.c.l.b16 %v304
        %v385 = vunpack.c.l.b16 %v305
        %v386 = vunpack.c.l.b16 %v306
        %v387 = vunpack.c.l.b16 %v307
        %v388 = vunpack.c.l.b16 %v308
        %v389 = vunpack.c.l.b16 %v309
        %v390 = vpack.c.b16 %v359, %v358
        %v391 = vpack.c.b16 %v361, %v360
        %v392 = vpack.c.b16 %v363, %v362
        %v393 = vpack.c.b16 %v365, %v364
        %v394 = vpack.c.b16 %v367, %v366
        %v395 = vpack.c.b16 %v369, %v368
        %v396 = vpack.c.b16 %v371, %v370
        %v397 = vpack.c.b16 %v373, %v372
        %v398 = vpack.c.b16 %v375, %v374
        %v399 = vpack.c.b16 %v377, %v376
        %v400 = vpack.c.b16 %v379, %v378
        %v401 = vpack.c.b16 %v381, %v380
        %v402 = vpack.c.b16 %v383, %v382
        %v403 = vpack.c.b16 %v385, %v384
        %v404 = vpack.c.b16 %v387, %v386
        %v405 = vpack.c.b16 %v389, %v388
        %v438 = vunpack.c.l.b16 %v310
        %v439 = vunpack.c.l.b16 %v311
        %v440 = vunpack.c.l.b16 %v312
        %v441 = vunpack.c.l.b16 %v313
        %v442 = vunpack.c.l.b16 %v314
        %v443 = vunpack.c.l.b16 %v315
        %v444 = vunpack.c.l.b16 %v316
        %v445 = vunpack.c.l.b16 %v317
        %v446 = vunpack.c.l.b16 %v318
        %v447 = vunpack.c.l.b16 %v319
        %v448 = vunpack.c.l.b16 %v320
        %v449 = vunpack.c.l.b16 %v321
        %v450 = vunpack.c.l.b16 %v322
        %v451 = vunpack.c.l.b16 %v323
        %v452 = vunpack.c.l.b16 %v324
        %v453 = vunpack.c.l.b16 %v325
        %v454 = vpack.c.b16 %v439, %v438
        %v455 = vpack.c.b16 %v441, %v440
        %v456 = vpack.c.b16 %v443, %v442
        %v457 = vpack.c.b16 %v445, %v444
        %v458 = vpack.c.b16 %v447, %v446
        %v459 = vpack.c.b16 %v449, %v448
        %v460 = vpack.c.b16 %v451, %v450
        %v461 = vpack.c.b16 %v453, %v452
        %470 = vmatpush.bf16.msra.mxu0 %v461
        %471 = vmatpush.bf16.msra.mxu0 %v460
        %472 = vmatpush.bf16.msra.mxu0 %v459
        %473 = vmatpush.bf16.msra.mxu0 %v458
        %474 = vmatpush.bf16.msra.mxu0 %v457
        %475 = vmatpush.bf16.msra.mxu0 %v456
        %476 = vmatpush.bf16.msra.mxu0 %v455
        %477 = vmatpush.bf16.msra.mxu0 %v454
        %478 = vmatmul.bf16.gmra.mxu0 %v390
        %v479 = vpop.f32.mrf.mxu0
        %v480 = vadd.f32 0.0, %v479
        %v481 = vpop.f32.mrf.mxu0
        %v482 = vadd.f32 0.0, %v481
        %483 = vmatmul.bf16.gmra.mxu0 %v391
        %v484 = vpop.f32.mrf.mxu0
        %v485 = vadd.f32 0.0, %v484
        %v486 = vpop.f32.mrf.mxu0
        %v487 = vadd.f32 0.0, %v486
        %488 = vmatmul.bf16.gmra.mxu0 %v392
        %v489 = vpop.f32.mrf.mxu0
        %v490 = vadd.f32 0.0, %v489
        %v491 = vpop.f32.mrf.mxu0
        %v492 = vadd.f32 0.0, %v491
        %493 = vmatmul.bf16.gmra.mxu0 %v393
        %v494 = vpop.f32.mrf.mxu0
        %v495 = vadd.f32 0.0, %v494
        %v496 = vpop.f32.mrf.mxu0
        %v497 = vadd.f32 0.0, %v496
        %498 = vmatmul.bf16.gmra.mxu0 %v394
        %v499 = vpop.f32.mrf.mxu0
        %v500 = vadd.f32 0.0, %v499
        %v501 = vpop.f32.mrf.mxu0
        %v502 = vadd.f32 0.0, %v501
        %503 = vmatmul.bf16.gmra.mxu0 %v395
        %v504 = vpop.f32.mrf.mxu0
        %v505 = vadd.f32 0.0, %v504
        %v506 = vpop.f32.mrf.mxu0
        %v507 = vadd.f32 0.0, %v506
        %508 = vmatmul.bf16.gmra.mxu0 %v396
        %v509 = vpop.f32.mrf.mxu0
        %v510 = vadd.f32 0.0, %v509
        %v511 = vpop.f32.mrf.mxu0
        %v512 = vadd.f32 0.0, %v511
        %513 = vmatmul.bf16.gmra.mxu0 %v397
        %v514 = vpop.f32.mrf.mxu0
        %v515 = vadd.f32 0.0, %v514
        %v516 = vpop.f32.mrf.mxu0
        %v517 = vadd.f32 0.0, %v516
        %518 = vmatmul.bf16.gmra.mxu0 %v398
        %v519 = vpop.f32.mrf.mxu0
        %v520 = vadd.f32 0.0, %v519
        %v521 = vpop.f32.mrf.mxu0
        %v522 = vadd.f32 0.0, %v521
        %523 = vmatmul.bf16.gmra.mxu0 %v399
        %v524 = vpop.f32.mrf.mxu0
        %v525 = vadd.f32 0.0, %v524
        %v526 = vpop.f32.mrf.mxu0
        %v527 = vadd.f32 0.0, %v526
        %528 = vmatmul.bf16.gmra.mxu0 %v400
        %v529 = vpop.f32.mrf.mxu0
        %v530 = vadd.f32 0.0, %v529
        %v531 = vpop.f32.mrf.mxu0
        %v532 = vadd.f32 0.0, %v531
        %533 = vmatmul.bf16.gmra.mxu0 %v401
        %v534 = vpop.f32.mrf.mxu0
        %v535 = vadd.f32 0.0, %v534
        %v536 = vpop.f32.mrf.mxu0
        %v537 = vadd.f32 0.0, %v536
        %538 = vmatmul.bf16.gmra.mxu0 %v402
        %v539 = vpop.f32.mrf.mxu0
        %v540 = vadd.f32 0.0, %v539
        %v541 = vpop.f32.mrf.mxu0
        %v542 = vadd.f32 0.0, %v541
        %543 = vmatmul.bf16.gmra.mxu0 %v403
        %v544 = vpop.f32.mrf.mxu0
        %v545 = vadd.f32 0.0, %v544
        %v546 = vpop.f32.mrf.mxu0
        %v547 = vadd.f32 0.0, %v546
        %548 = vmatmul.bf16.gmra.mxu0 %v404
        %v549 = vpop.f32.mrf.mxu0
        %v550 = vadd.f32 0.0, %v549
        %v551 = vpop.f32.mrf.mxu0
        %v552 = vadd.f32 0.0, %v551
        %553 = vmatmul.bf16.gmra.mxu0 %v405
        %v554 = vpop.f32.mrf.mxu0
        %v555 = vadd.f32 0.0, %v554
        %v556 = vpop.f32.mrf.mxu0
        %v557 = vadd.f32 0.0, %v556
        %558 = vdwg.mxu0
        %v559 = vld [vmem:[%s2] sm:$0x1]
        %v561 = vperm.slane %v559, 0
        %v563 = vmul.f32 %v480, %v561
        %v564 = vmul.f32 %v482, %v561
        %v565 = vmul.f32 %v485, %v561
        %v566 = vmul.f32 %v487, %v561
        %v567 = vmul.f32 %v490, %v561
        %v568 = vmul.f32 %v492, %v561
        %v569 = vmul.f32 %v495, %v561
        %v570 = vmul.f32 %v497, %v561
        %v571 = vmul.f32 %v500, %v561
        %v572 = vmul.f32 %v502, %v561
        %v573 = vmul.f32 %v505, %v561
        %v574 = vmul.f32 %v507, %v561
        %v575 = vmul.f32 %v510, %v561
        %v576 = vmul.f32 %v512, %v561
        %v577 = vmul.f32 %v515, %v561
        %v578 = vmul.f32 %v517, %v561
        %v579 = vmul.f32 %v520, %v561
        %v580 = vmul.f32 %v522, %v561
        %v581 = vmul.f32 %v525, %v561
        %v582 = vmul.f32 %v527, %v561
        %v583 = vmul.f32 %v530, %v561
        %v584 = vmul.f32 %v532, %v561
        %v585 = vmul.f32 %v535, %v561
        %v586 = vmul.f32 %v537, %v561
        %v587 = vmul.f32 %v540, %v561
        %v588 = vmul.f32 %v542, %v561
        %v589 = vmul.f32 %v545, %v561
        %v590 = vmul.f32 %v547, %v561
        %v591 = vmul.f32 %v550, %v561
        %v592 = vmul.f32 %v552, %v561
        %v593 = vmul.f32 %v555, %v561
        %v594 = vmul.f32 %v557, %v561
        %v595 = vld [vmem:[%s3] sm:$0x1]
        %v597 = vperm.slane %v595, 0
        %v599 = vadd.f32 %v563, %v597
        %v600 = vadd.f32 %v564, %v597
        %v601 = vadd.f32 %v565, %v597
        %v602 = vadd.f32 %v566, %v597
        %v603 = vadd.f32 %v567, %v597
        %v604 = vadd.f32 %v568, %v597
        %v605 = vadd.f32 %v569, %v597
        %v606 = vadd.f32 %v570, %v597
        %v607 = vadd.f32 %v571, %v597
        %v608 = vadd.f32 %v572, %v597
        %v609 = vadd.f32 %v573, %v597
        %v610 = vadd.f32 %v574, %v597
        %v611 = vadd.f32 %v575, %v597
        %v612 = vadd.f32 %v576, %v597
        %v613 = vadd.f32 %v577, %v597
        %v614 = vadd.f32 %v578, %v597
        %v615 = vadd.f32 %v579, %v597
        %v616 = vadd.f32 %v580, %v597
        %v617 = vadd.f32 %v581, %v597
        %v618 = vadd.f32 %v582, %v597
        %v619 = vadd.f32 %v583, %v597
        %v620 = vadd.f32 %v584, %v597
        %v621 = vadd.f32 %v585, %v597
        %v622 = vadd.f32 %v586, %v597
        %v623 = vadd.f32 %v587, %v597
        %v624 = vadd.f32 %v588, %v597
        %v625 = vadd.f32 %v589, %v597
        %v626 = vadd.f32 %v590, %v597
        %v627 = vadd.f32 %v591, %v597
        %v628 = vadd.f32 %v592, %v597
        %v629 = vadd.f32 %v593, %v597
        %v630 = vadd.f32 %v594, %v597
        %v631 = vmax.f32 %v599, 0.0
        %v632 = vmax.f32 %v600, 0.0
        %v633 = vmax.f32 %v601, 0.0
        %v634 = vmax.f32 %v602, 0.0
        %v635 = vmax.f32 %v603, 0.0
        %v636 = vmax.f32 %v604, 0.0
        %v637 = vmax.f32 %v605, 0.0
        %v638 = vmax.f32 %v606, 0.0
        %v639 = vmax.f32 %v607, 0.0
        %v640 = vmax.f32 %v608, 0.0
        %v641 = vmax.f32 %v609, 0.0
        %v642 = vmax.f32 %v610, 0.0
        %v643 = vmax.f32 %v611, 0.0
        %v644 = vmax.f32 %v612, 0.0
        %v645 = vmax.f32 %v613, 0.0
        %v646 = vmax.f32 %v614, 0.0
        %v647 = vmax.f32 %v615, 0.0
        %v648 = vmax.f32 %v616, 0.0
        %v649 = vmax.f32 %v617, 0.0
        %v650 = vmax.f32 %v618, 0.0
        %v651 = vmax.f32 %v619, 0.0
        %v652 = vmax.f32 %v620, 0.0
        %v653 = vmax.f32 %v621, 0.0
        %v654 = vmax.f32 %v622, 0.0
        %v655 = vmax.f32 %v623, 0.0
        %v656 = vmax.f32 %v624, 0.0
        %v657 = vmax.f32 %v625, 0.0
        %v658 = vmax.f32 %v626, 0.0
        %v659 = vmax.f32 %v627, 0.0
        %v660 = vmax.f32 %v628, 0.0
        %v661 = vmax.f32 %v629, 0.0
        %v662 = vmax.f32 %v630, 0.0
        %v663 = vpack.c.bf16 %v631, %v631
        %v664 = vpack.c.bf16 %v632, %v632
        %v665 = vpack.c.bf16 %v633, %v633
        %v666 = vpack.c.bf16 %v634, %v634
        %v667 = vpack.c.bf16 %v635, %v635
        %v668 = vpack.c.bf16 %v636, %v636
        %v669 = vpack.c.bf16 %v637, %v637
        %v670 = vpack.c.bf16 %v638, %v638
        %v671 = vpack.c.bf16 %v639, %v639
        %v672 = vpack.c.bf16 %v640, %v640
        %v673 = vpack.c.bf16 %v641, %v641
        %v674 = vpack.c.bf16 %v642, %v642
        %v675 = vpack.c.bf16 %v643, %v643
        %v676 = vpack.c.bf16 %v644, %v644
        %v677 = vpack.c.bf16 %v645, %v645
        %v678 = vpack.c.bf16 %v646, %v646
        %v679 = vpack.c.bf16 %v647, %v647
        %v680 = vpack.c.bf16 %v648, %v648
        %v681 = vpack.c.bf16 %v649, %v649
        %v682 = vpack.c.bf16 %v650, %v650
        %v683 = vpack.c.bf16 %v651, %v651
        %v684 = vpack.c.bf16 %v652, %v652
        %v685 = vpack.c.bf16 %v653, %v653
        %v686 = vpack.c.bf16 %v654, %v654
        %v687 = vpack.c.bf16 %v655, %v655
        %v688 = vpack.c.bf16 %v656, %v656
        %v689 = vpack.c.bf16 %v657, %v657
        %v690 = vpack.c.bf16 %v658, %v658
        %v691 = vpack.c.bf16 %v659, %v659
        %v692 = vpack.c.bf16 %v660, %v660
        %v693 = vpack.c.bf16 %v661, %v661
        %v694 = vpack.c.bf16 %v662, %v662
        %v727 = vunpack.c.l.b16 %v663
        %v728 = vunpack.c.l.b16 %v664
        %v729 = vunpack.c.l.b16 %v665
        %v730 = vunpack.c.l.b16 %v666
        %v731 = vunpack.c.l.b16 %v667
        %v732 = vunpack.c.l.b16 %v668
        %v733 = vunpack.c.l.b16 %v669
        %v734 = vunpack.c.l.b16 %v670
        %v735 = vunpack.c.l.b16 %v671
        %v736 = vunpack.c.l.b16 %v672
        %v737 = vunpack.c.l.b16 %v673
        %v738 = vunpack.c.l.b16 %v674
        %v739 = vunpack.c.l.b16 %v675
        %v740 = vunpack.c.l.b16 %v676
        %v741 = vunpack.c.l.b16 %v677
        %v742 = vunpack.c.l.b16 %v678
        %v743 = vunpack.c.l.b16 %v679
        %v744 = vunpack.c.l.b16 %v680
        %v745 = vunpack.c.l.b16 %v681
        %v746 = vunpack.c.l.b16 %v682
        %v747 = vunpack.c.l.b16 %v683
        %v748 = vunpack.c.l.b16 %v684
        %v749 = vunpack.c.l.b16 %v685
        %v750 = vunpack.c.l.b16 %v686
        %v751 = vunpack.c.l.b16 %v687
        %v752 = vunpack.c.l.b16 %v688
        %v753 = vunpack.c.l.b16 %v689
        %v754 = vunpack.c.l.b16 %v690
        %v755 = vunpack.c.l.b16 %v691
        %v756 = vunpack.c.l.b16 %v692
        %v757 = vunpack.c.l.b16 %v693
        %v758 = vunpack.c.l.b16 %v694
        %v759 = vpack.c.b16 %v728, %v727
        %v760 = vpack.c.b16 %v730, %v729
        %v761 = vpack.c.b16 %v732, %v731
        %v762 = vpack.c.b16 %v734, %v733
        %v763 = vpack.c.b16 %v736, %v735
        %v764 = vpack.c.b16 %v738, %v737
        %v765 = vpack.c.b16 %v740, %v739
        %v766 = vpack.c.b16 %v742, %v741
        %v767 = vpack.c.b16 %v744, %v743
        %v768 = vpack.c.b16 %v746, %v745
        %v769 = vpack.c.b16 %v748, %v747
        %v770 = vpack.c.b16 %v750, %v749
        %v771 = vpack.c.b16 %v752, %v751
        %v772 = vpack.c.b16 %v754, %v753
        %v773 = vpack.c.b16 %v756, %v755
        %v774 = vpack.c.b16 %v758, %v757
        %v776 = vshrl.u32 0, 16
        %v778 = vrot.slane %v776, 7
        %v779 = vshll.u32 0, 16
        %v781 = vor.u32 %v778, %v779
        %v783 = vshrl.u32 %v759, 16
        %v785 = vrot.slane %v783, 7
        %v786 = vshll.u32 %v759, 16
        %v788 = vor.u32 %v785, %v786
        %v790 = vshrl.u32 %v760, 16
        %v792 = vrot.slane %v790, 7
        %v793 = vshll.u32 %v760, 16
        %v795 = vor.u32 %v792, %v793
        %v797 = vshrl.u32 %v761, 16
        %v799 = vrot.slane %v797, 7
        %v800 = vshll.u32 %v761, 16
        %v802 = vor.u32 %v799, %v800
        %v804 = vshrl.u32 %v762, 16
        %v806 = vrot.slane %v804, 7
        %v807 = vshll.u32 %v762, 16
        %v809 = vor.u32 %v806, %v807
        %v811 = vshrl.u32 %v763, 16
        %v813 = vrot.slane %v811, 7
        %v814 = vshll.u32 %v763, 16
        %v816 = vor.u32 %v813, %v814
        %v818 = vshrl.u32 %v764, 16
        %v820 = vrot.slane %v818, 7
        %v821 = vshll.u32 %v764, 16
        %v823 = vor.u32 %v820, %v821
        %v825 = vshrl.u32 %v765, 16
        %v827 = vrot.slane %v825, 7
        %v828 = vshll.u32 %v765, 16
        %v830 = vor.u32 %v827, %v828
        %v832 = vshrl.u32 %v766, 16
        %v834 = vrot.slane %v832, 7
        %v835 = vshll.u32 %v766, 16
        %v837 = vor.u32 %v834, %v835
        %v839 = vshrl.u32 %v767, 16
        %v841 = vrot.slane %v839, 7
        %v842 = vshll.u32 %v767, 16
        %v844 = vor.u32 %v841, %v842
        %v846 = vshrl.u32 %v768, 16
        %v848 = vrot.slane %v846, 7
        %v849 = vshll.u32 %v768, 16
        %v851 = vor.u32 %v848, %v849
        %v853 = vshrl.u32 %v769, 16
        %v855 = vrot.slane %v853, 7
        %v856 = vshll.u32 %v769, 16
        %v858 = vor.u32 %v855, %v856
        %v860 = vshrl.u32 %v770, 16
        %v862 = vrot.slane %v860, 7
        %v863 = vshll.u32 %v770, 16
        %v865 = vor.u32 %v862, %v863
        %v867 = vshrl.u32 %v771, 16
        %v869 = vrot.slane %v867, 7
        %v870 = vshll.u32 %v771, 16
        %v872 = vor.u32 %v869, %v870
        %v874 = vshrl.u32 %v772, 16
        %v876 = vrot.slane %v874, 7
        %v877 = vshll.u32 %v772, 16
        %v879 = vor.u32 %v876, %v877
        %v881 = vshrl.u32 %v773, 16
        %v883 = vrot.slane %v881, 7
        %v884 = vshll.u32 %v773, 16
        %v886 = vor.u32 %v883, %v884
        %v888 = vshrl.u32 %v774, 16
        %v890 = vrot.slane %v888, 7
        %v891 = vshll.u32 %v774, 16
        %v893 = vor.u32 %v890, %v891
        %vm928 = vcmask 1040384
        %vm929 = vsmask.f32 256
        %vm930 = vmand %vm928, %vm929
        %v931 = vsel %vm930, 0, %v781
        %v932 = vsel %vm930, 0, %v788
        %v933 = vsel %vm930, 0, %v795
        %v934 = vsel %vm930, 0, %v802
        %v935 = vsel %vm930, 0, %v809
        %v936 = vsel %vm930, 0, %v816
        %v937 = vsel %vm930, 0, %v823
        %v938 = vsel %vm930, 0, %v830
        %v939 = vsel %vm930, 0, %v837
        %v940 = vsel %vm930, 0, %v844
        %v941 = vsel %vm930, 0, %v851
        %v942 = vsel %vm930, 0, %v858
        %v943 = vsel %vm930, 0, %v865
        %v944 = vsel %vm930, 0, %v872
        %v945 = vsel %vm930, 0, %v879
        %v946 = vsel %vm930, 0, %v886
        %v947 = vsel %vm930, 0, %v893
        %v948 = vsel %vm930, %v778, 0
        %v949 = vsel %vm930, %v785, 0
        %v950 = vsel %vm930, %v792, 0
        %v951 = vsel %vm930, %v799, 0
        %v952 = vsel %vm930, %v806, 0
        %v953 = vsel %vm930, %v813, 0
        %v954 = vsel %vm930, %v820, 0
        %v955 = vsel %vm930, %v827, 0
        %v956 = vsel %vm930, %v834, 0
        %v957 = vsel %vm930, %v841, 0
        %v958 = vsel %vm930, %v848, 0
        %v959 = vsel %vm930, %v855, 0
        %v960 = vsel %vm930, %v862, 0
        %v961 = vsel %vm930, %v869, 0
        %v962 = vsel %vm930, %v876, 0
        %v963 = vsel %vm930, %v883, 0
        %v964 = vsel %vm930, %v890, 0
        %vm965 = vsmask.f32 7424
        %v967 = vshrl.u32 %v931, 16
        %v969 = vshll.u32 %v931, 16
        %v971 = vrot.slane %v969, 1
        %v972 = vor.u32 %v967, %v971
        %v974 = vshll.u32 %v948, 16
        %v976 = vrot.slane %v974, 1
        %v977 = vsel %vm965, %v972, %v976
        %v979 = vshrl.u32 %v932, 16
        %v981 = vshll.u32 %v932, 16
        %v983 = vrot.slane %v981, 1
        %v984 = vor.u32 %v979, %v983
        %v986 = vshll.u32 %v949, 16
        %v988 = vrot.slane %v986, 1
        %v989 = vsel %vm965, %v984, %v988
        %v991 = vshrl.u32 %v933, 16
        %v993 = vshll.u32 %v933, 16
        %v995 = vrot.slane %v993, 1
        %v996 = vor.u32 %v991, %v995
        %v998 = vshll.u32 %v950, 16
        %v1000 = vrot.slane %v998, 1
        %v1001 = vsel %vm965, %v996, %v1000
        %v1003 = vshrl.u32 %v934, 16
        %v1005 = vshll.u32 %v934, 16
        %v1007 = vrot.slane %v1005, 1
        %v1008 = vor.u32 %v1003, %v1007
        %v1010 = vshll.u32 %v951, 16
        %v1012 = vrot.slane %v1010, 1
        %v1013 = vsel %vm965, %v1008, %v1012
        %v1015 = vshrl.u32 %v935, 16
        %v1017 = vshll.u32 %v935, 16
        %v1019 = vrot.slane %v1017, 1
        %v1020 = vor.u32 %v1015, %v1019
        %v1022 = vshll.u32 %v952, 16
        %v1024 = vrot.slane %v1022, 1
        %v1025 = vsel %vm965, %v1020, %v1024
        %v1027 = vshrl.u32 %v936, 16
        %v1029 = vshll.u32 %v936, 16
        %v1031 = vrot.slane %v1029, 1
        %v1032 = vor.u32 %v1027, %v1031
        %v1034 = vshll.u32 %v953, 16
        %v1036 = vrot.slane %v1034, 1
        %v1037 = vsel %vm965, %v1032, %v1036
        %v1039 = vshrl.u32 %v937, 16
        %v1041 = vshll.u32 %v937, 16
        %v1043 = vrot.slane %v1041, 1
        %v1044 = vor.u32 %v1039, %v1043
        %v1046 = vshll.u32 %v954, 16
        %v1048 = vrot.slane %v1046, 1
        %v1049 = vsel %vm965, %v1044, %v1048
        %v1051 = vshrl.u32 %v938, 16
        %v1053 = vshll.u32 %v938, 16
        %v1055 = vrot.slane %v1053, 1
        %v1056 = vor.u32 %v1051, %v1055
        %v1058 = vshll.u32 %v955, 16
        %v1060 = vrot.slane %v1058, 1
        %v1061 = vsel %vm965, %v1056, %v1060
        %v1063 = vshrl.u32 %v939, 16
        %v1065 = vshll.u32 %v939, 16
        %v1067 = vrot.slane %v1065, 1
        %v1068 = vor.u32 %v1063, %v1067
        %v1070 = vshll.u32 %v956, 16
        %v1072 = vrot.slane %v1070, 1
        %v1073 = vsel %vm965, %v1068, %v1072
        %v1075 = vshrl.u32 %v940, 16
        %v1077 = vshll.u32 %v940, 16
        %v1079 = vrot.slane %v1077, 1
        %v1080 = vor.u32 %v1075, %v1079
        %v1082 = vshll.u32 %v957, 16
        %v1084 = vrot.slane %v1082, 1
        %v1085 = vsel %vm965, %v1080, %v1084
        %v1087 = vshrl.u32 %v941, 16
        %v1089 = vshll.u32 %v941, 16
        %v1091 = vrot.slane %v1089, 1
        %v1092 = vor.u32 %v1087, %v1091
        %v1094 = vshll.u32 %v958, 16
        %v1096 = vrot.slane %v1094, 1
        %v1097 = vsel %vm965, %v1092, %v1096
        %v1099 = vshrl.u32 %v942, 16
        %v1101 = vshll.u32 %v942, 16
        %v1103 = vrot.slane %v1101, 1
        %v1104 = vor.u32 %v1099, %v1103
        %v1106 = vshll.u32 %v959, 16
        %v1108 = vrot.slane %v1106, 1
        %v1109 = vsel %vm965, %v1104, %v1108
        %v1111 = vshrl.u32 %v943, 16
        %v1113 = vshll.u32 %v943, 16
        %v1115 = vrot.slane %v1113, 1
        %v1116 = vor.u32 %v1111, %v1115
        %v1118 = vshll.u32 %v960, 16
        %v1120 = vrot.slane %v1118, 1
        %v1121 = vsel %vm965, %v1116, %v1120
        %v1123 = vshrl.u32 %v944, 16
        %v1125 = vshll.u32 %v944, 16
        %v1127 = vrot.slane %v1125, 1
        %v1128 = vor.u32 %v1123, %v1127
        %v1130 = vshll.u32 %v961, 16
        %v1132 = vrot.slane %v1130, 1
        %v1133 = vsel %vm965, %v1128, %v1132
        %v1135 = vshrl.u32 %v945, 16
        %v1137 = vshll.u32 %v945, 16
        %v1139 = vrot.slane %v1137, 1
        %v1140 = vor.u32 %v1135, %v1139
        %v1142 = vshll.u32 %v962, 16
        %v1144 = vrot.slane %v1142, 1
        %v1145 = vsel %vm965, %v1140, %v1144
        %v1147 = vshrl.u32 %v946, 16
        %v1149 = vshll.u32 %v946, 16
        %v1151 = vrot.slane %v1149, 1
        %v1152 = vor.u32 %v1147, %v1151
        %v1154 = vshll.u32 %v963, 16
        %v1156 = vrot.slane %v1154, 1
        %v1157 = vsel %vm965, %v1152, %v1156
        %vm1206 = vcmask 1046528
        %v1207 = vrot.slane %v931, 1
        %v1208 = vrot.slane %v948, 1
        %v1209 = vsel %vm1206, %v1207, %v1208
        %v1210 = vrot.slane %v932, 1
        %v1211 = vrot.slane %v949, 1
        %v1212 = vsel %vm1206, %v1210, %v1211
        %v1213 = vrot.slane %v933, 1
        %v1214 = vrot.slane %v950, 1
        %v1215 = vsel %vm1206, %v1213, %v1214
        %v1216 = vrot.slane %v934, 1
        %v1217 = vrot.slane %v951, 1
        %v1218 = vsel %vm1206, %v1216, %v1217
        %v1219 = vrot.slane %v935, 1
        %v1220 = vrot.slane %v952, 1
        %v1221 = vsel %vm1206, %v1219, %v1220
        %v1222 = vrot.slane %v936, 1
        %v1223 = vrot.slane %v953, 1
        %v1224 = vsel %vm1206, %v1222, %v1223
        %v1225 = vrot.slane %v937, 1
        %v1226 = vrot.slane %v954, 1
        %v1227 = vsel %vm1206, %v1225, %v1226
        %v1228 = vrot.slane %v938, 1
        %v1229 = vrot.slane %v955, 1
        %v1230 = vsel %vm1206, %v1228, %v1229
        %v1231 = vrot.slane %v939, 1
        %v1232 = vrot.slane %v956, 1
        %v1233 = vsel %vm1206, %v1231, %v1232
        %v1234 = vrot.slane %v940, 1
        %v1235 = vrot.slane %v957, 1
        %v1236 = vsel %vm1206, %v1234, %v1235
        %v1237 = vrot.slane %v941, 1
        %v1238 = vrot.slane %v958, 1
        %v1239 = vsel %vm1206, %v1237, %v1238
        %v1240 = vrot.slane %v942, 1
        %v1241 = vrot.slane %v959, 1
        %v1242 = vsel %vm1206, %v1240, %v1241
        %v1243 = vrot.slane %v943, 1
        %v1244 = vrot.slane %v960, 1
        %v1245 = vsel %vm1206, %v1243, %v1244
        %v1246 = vrot.slane %v944, 1
        %v1247 = vrot.slane %v961, 1
        %v1248 = vsel %vm1206, %v1246, %v1247
        %v1249 = vrot.slane %v945, 1
        %v1250 = vrot.slane %v962, 1
        %v1251 = vsel %vm1206, %v1249, %v1250
        %v1252 = vrot.slane %v946, 1
        %v1253 = vrot.slane %v963, 1
        %v1254 = vsel %vm1206, %v1252, %v1253
        %v1272 = vshrl.u32 %v947, 16
        %v1274 = vshll.u32 %v947, 16
        %v1276 = vrot.slane %v1274, 1
        %v1277 = vor.u32 %v1272, %v1276
        %v1279 = vshll.u32 %v964, 16
        %v1281 = vrot.slane %v1279, 1
        %v1282 = vsel %vm965, %v1277, %v1281
        %v1286 = vrot.slane %v947, 1
        %v1287 = vrot.slane %v964, 1
        %v1288 = vsel %vm1206, %v1286, %v1287
        %v1290 = vld [vmem:[%s4] sm:$0xf]
        %v1291 = vld [vmem:[%s4 + $0x4] sm:$0xf]
        %v1292 = vld [vmem:[%s4 + $0x8] sm:$0xf]
        %v1293 = vld [vmem:[%s4 + $0xc] sm:$0xf]
        %v1294 = vld [vmem:[%s4 + $0x10] sm:$0xf]
        %v1295 = vld [vmem:[%s4 + $0x14] sm:$0xf]
        %v1296 = vld [vmem:[%s4 + $0x18] sm:$0xf]
        %v1297 = vld [vmem:[%s4 + $0x1c] sm:$0xf]
        %v1298 = vld [vmem:[%s4 + $0x20] sm:$0xf]
        %v1299 = vld [vmem:[%s4 + $0x24] sm:$0xf]
        %v1300 = vld [vmem:[%s4 + $0x28] sm:$0xf]
        %v1301 = vld [vmem:[%s4 + $0x2c] sm:$0xf]
        %v1302 = vld [vmem:[%s4 + $0x30] sm:$0xf]
        %v1303 = vld [vmem:[%s4 + $0x34] sm:$0xf]
        %v1304 = vld [vmem:[%s4 + $0x38] sm:$0xf]
        %v1305 = vld [vmem:[%s4 + $0x3c] sm:$0xf]
        %v1306 = vld [vmem:[%s4 + $0x40] sm:$0xf]
        %v1307 = vld [vmem:[%s4 + $0x44] sm:$0xf]
        %v1308 = vld [vmem:[%s4 + $0x48] sm:$0xf]
        %v1309 = vld [vmem:[%s4 + $0x4c] sm:$0xf]
        %v1310 = vld [vmem:[%s4 + $0x50] sm:$0xf]
        %v1311 = vld [vmem:[%s4 + $0x54] sm:$0xf]
        %v1312 = vld [vmem:[%s4 + $0x58] sm:$0xf]
        %v1313 = vld [vmem:[%s4 + $0x5c] sm:$0xf]
        %v1314 = vld [vmem:[%s4 + $0x60] sm:$0xf]
        %v1315 = vld [vmem:[%s4 + $0x64] sm:$0xf]
        %v1316 = vld [vmem:[%s4 + $0x68] sm:$0xf]
        %v1317 = vld [vmem:[%s4 + $0x6c] sm:$0xf]
        %v1318 = vld [vmem:[%s4 + $0x70] sm:$0xf]
        %v1319 = vld [vmem:[%s4 + $0x74] sm:$0xf]
        %v1320 = vld [vmem:[%s4 + $0x78] sm:$0xf]
        %v1321 = vld [vmem:[%s4 + $0x7c] sm:$0xf]
        %v1322 = vld [vmem:[%s4 + $0x80] sm:$0xf]
        %v1323 = vld [vmem:[%s4 + $0x84] sm:$0xf]
        %v1324 = vld [vmem:[%s4 + $0x88] sm:$0xf]
        %v1325 = vld [vmem:[%s4 + $0x8c] sm:$0xf]
        %v1326 = vld [vmem:[%s4 + $0x90] sm:$0xf]
        %v1327 = vld [vmem:[%s4 + $0x94] sm:$0xf]
        %v1328 = vld [vmem:[%s4 + $0x98] sm:$0xf]
        %v1329 = vld [vmem:[%s4 + $0x9c] sm:$0xf]
        %v1330 = vld [vmem:[%s4 + $0xa0] sm:$0xf]
        %v1331 = vld [vmem:[%s4 + $0xa4] sm:$0xf]
        %v1332 = vld [vmem:[%s4 + $0xa8] sm:$0xf]
        %v1333 = vld [vmem:[%s4 + $0xac] sm:$0xf]
        %v1334 = vld [vmem:[%s4 + $0xb0] sm:$0xf]
        %v1335 = vld [vmem:[%s4 + $0xb4] sm:$0xf]
        %v1336 = vld [vmem:[%s4 + $0xb8] sm:$0xf]
        %v1337 = vld [vmem:[%s4 + $0xbc] sm:$0xf]
        %v1338 = vld [vmem:[%s4 + $0xc0] sm:$0xf]
        %v1339 = vld [vmem:[%s4 + $0xc4] sm:$0xf]
        %v1340 = vld [vmem:[%s4 + $0xc8] sm:$0xf]
        %v1341 = vld [vmem:[%s4 + $0xcc] sm:$0xf]
        %v1342 = vld [vmem:[%s4 + $0xd0] sm:$0xf]
        %v1343 = vld [vmem:[%s4 + $0xd4] sm:$0xf]
        %v1344 = vld [vmem:[%s4 + $0xd8] sm:$0xf]
        %v1345 = vld [vmem:[%s4 + $0xdc] sm:$0xf]
        %v1346 = vld [vmem:[%s4 + $0xe0] sm:$0xf]
        %v1347 = vld [vmem:[%s4 + $0xe4] sm:$0xf]
        %v1348 = vld [vmem:[%s4 + $0xe8] sm:$0xf]
        %v1349 = vld [vmem:[%s4 + $0xec] sm:$0xf]
        %v1350 = vld [vmem:[%s4 + $0xf0] sm:$0xf]
        %v1351 = vld [vmem:[%s4 + $0xf4] sm:$0xf]
        %v1352 = vld [vmem:[%s4 + $0xf8] sm:$0xf]
        %v1353 = vld [vmem:[%s4 + $0xfc] sm:$0xf]
        %v1354 = vld [vmem:[%s4 + $0x100] sm:$0xf]
        %v1355 = vld [vmem:[%s4 + $0x104] sm:$0xf]
        %v1356 = vld [vmem:[%s4 + $0x108] sm:$0xf]
        %v1357 = vld [vmem:[%s4 + $0x10c] sm:$0xf]
        %v1358 = vld [vmem:[%s4 + $0x110] sm:$0xf]
        %v1359 = vld [vmem:[%s4 + $0x114] sm:$0xf]
        %v1360 = vld [vmem:[%s4 + $0x118] sm:$0xf]
        %v1361 = vld [vmem:[%s4 + $0x11c] sm:$0xf]
        %v1362 = vld [vmem:[%s4 + $0x120] sm:$0xf]
        %v1363 = vld [vmem:[%s4 + $0x124] sm:$0xf]
        %v1364 = vld [vmem:[%s4 + $0x128] sm:$0xf]
        %v1365 = vld [vmem:[%s4 + $0x12c] sm:$0xf]
        %v1366 = vld [vmem:[%s4 + $0x130] sm:$0xf]
        %v1367 = vld [vmem:[%s4 + $0x134] sm:$0xf]
        %v1368 = vld [vmem:[%s4 + $0x138] sm:$0xf]
        %v1369 = vld [vmem:[%s4 + $0x13c] sm:$0xf]
        %v1370 = vld [vmem:[%s4 + $0x140] sm:$0xf]
        %v1371 = vld [vmem:[%s4 + $0x144] sm:$0xf]
        %v1372 = vld [vmem:[%s4 + $0x148] sm:$0xf]
        %v1373 = vld [vmem:[%s4 + $0x14c] sm:$0xf]
        %v1374 = vld [vmem:[%s4 + $0x150] sm:$0xf]
        %v1375 = vld [vmem:[%s4 + $0x154] sm:$0xf]
        %v1376 = vld [vmem:[%s4 + $0x158] sm:$0xf]
        %v1377 = vld [vmem:[%s4 + $0x15c] sm:$0xf]
        %v1378 = vld [vmem:[%s4 + $0x160] sm:$0xf]
        %v1379 = vld [vmem:[%s4 + $0x164] sm:$0xf]
        %v1380 = vld [vmem:[%s4 + $0x168] sm:$0xf]
        %v1381 = vld [vmem:[%s4 + $0x16c] sm:$0xf]
        %v1382 = vld [vmem:[%s4 + $0x170] sm:$0xf]
        %v1383 = vld [vmem:[%s4 + $0x174] sm:$0xf]
        %v1384 = vld [vmem:[%s4 + $0x178] sm:$0xf]
        %v1385 = vld [vmem:[%s4 + $0x17c] sm:$0xf]
        %v1386 = vld [vmem:[%s4 + $0x180] sm:$0xf]
        %v1387 = vld [vmem:[%s4 + $0x184] sm:$0xf]
        %v1388 = vld [vmem:[%s4 + $0x188] sm:$0xf]
        %v1389 = vld [vmem:[%s4 + $0x18c] sm:$0xf]
        %v1390 = vld [vmem:[%s4 + $0x190] sm:$0xf]
        %v1391 = vld [vmem:[%s4 + $0x194] sm:$0xf]
        %v1392 = vld [vmem:[%s4 + $0x198] sm:$0xf]
        %v1393 = vld [vmem:[%s4 + $0x19c] sm:$0xf]
        %v1394 = vld [vmem:[%s4 + $0x1a0] sm:$0xf]
        %v1395 = vld [vmem:[%s4 + $0x1a4] sm:$0xf]
        %v1396 = vld [vmem:[%s4 + $0x1a8] sm:$0xf]
        %v1397 = vld [vmem:[%s4 + $0x1ac] sm:$0xf]
        %v1398 = vld [vmem:[%s4 + $0x1b0] sm:$0xf]
        %v1399 = vld [vmem:[%s4 + $0x1b4] sm:$0xf]
        %v1400 = vld [vmem:[%s4 + $0x1b8] sm:$0xf]
        %v1401 = vld [vmem:[%s4 + $0x1bc] sm:$0xf]
        %v1402 = vld [vmem:[%s4 + $0x1c0] sm:$0xf]
        %v1403 = vld [vmem:[%s4 + $0x1c4] sm:$0xf]
        %v1404 = vld [vmem:[%s4 + $0x1c8] sm:$0xf]
        %v1405 = vld [vmem:[%s4 + $0x1cc] sm:$0xf]
        %v1406 = vld [vmem:[%s4 + $0x1d0] sm:$0xf]
        %v1407 = vld [vmem:[%s4 + $0x1d4] sm:$0xf]
        %v1408 = vld [vmem:[%s4 + $0x1d8] sm:$0xf]
        %v1409 = vld [vmem:[%s4 + $0x1dc] sm:$0xf]
        %v1410 = vld [vmem:[%s4 + $0x1e0] sm:$0xf]
        %v1411 = vld [vmem:[%s4 + $0x1e4] sm:$0xf]
        %v1412 = vld [vmem:[%s4 + $0x1e8] sm:$0xf]
        %v1413 = vld [vmem:[%s4 + $0x1ec] sm:$0xf]
        %v1414 = vld [vmem:[%s4 + $0x1f0] sm:$0xf]
        %v1415 = vld [vmem:[%s4 + $0x1f4] sm:$0xf]
        %v1416 = vld [vmem:[%s4 + $0x1f8] sm:$0xf]
        %v1417 = vld [vmem:[%s4 + $0x1fc] sm:$0xf]
        %v1418 = vld [vmem:[%s4 + $0x200] sm:$0xf]
        %v1419 = vld [vmem:[%s4 + $0x204] sm:$0xf]
        %v1420 = vld [vmem:[%s4 + $0x208] sm:$0xf]
        %v1421 = vld [vmem:[%s4 + $0x20c] sm:$0xf]
        %v1422 = vld [vmem:[%s4 + $0x210] sm:$0xf]
        %v1423 = vld [vmem:[%s4 + $0x214] sm:$0xf]
        %v1424 = vld [vmem:[%s4 + $0x218] sm:$0xf]
        %v1425 = vld [vmem:[%s4 + $0x21c] sm:$0xf]
        %v1426 = vld [vmem:[%s4 + $0x220] sm:$0xf]
        %v1427 = vld [vmem:[%s4 + $0x224] sm:$0xf]
        %v1428 = vld [vmem:[%s4 + $0x228] sm:$0xf]
        %v1429 = vld [vmem:[%s4 + $0x22c] sm:$0xf]
        %v1430 = vld [vmem:[%s4 + $0x230] sm:$0xf]
        %v1431 = vld [vmem:[%s4 + $0x234] sm:$0xf]
        %v1432 = vld [vmem:[%s4 + $0x238] sm:$0xf]
        %v1433 = vld [vmem:[%s4 + $0x23c] sm:$0xf]
        %v1578 = vunpack.c.l.b16 %v1290
        %v1579 = vunpack.c.l.b16 %v1291
        %v1580 = vunpack.c.l.b16 %v1292
        %v1581 = vunpack.c.l.b16 %v1293
        %v1582 = vunpack.c.l.b16 %v1294
        %v1583 = vunpack.c.l.b16 %v1295
        %v1584 = vunpack.c.l.b16 %v1296
        %v1585 = vunpack.c.l.b16 %v1297
        %v1586 = vunpack.c.l.b16 %v1298
        %v1587 = vunpack.c.l.b16 %v1299
        %v1588 = vunpack.c.l.b16 %v1300
        %v1589 = vunpack.c.l.b16 %v1301
        %v1590 = vunpack.c.l.b16 %v1302
        %v1591 = vunpack.c.l.b16 %v1303
        %v1592 = vunpack.c.l.b16 %v1304
        %v1593 = vunpack.c.l.b16 %v1305
        %v1594 = vunpack.c.l.b16 %v1306
        %v1595 = vunpack.c.l.b16 %v1307
        %v1596 = vunpack.c.l.b16 %v1308
        %v1597 = vunpack.c.l.b16 %v1309
        %v1598 = vunpack.c.l.b16 %v1310
        %v1599 = vunpack.c.l.b16 %v1311
        %v1600 = vunpack.c.l.b16 %v1312
        %v1601 = vunpack.c.l.b16 %v1313
        %v1602 = vunpack.c.l.b16 %v1314
        %v1603 = vunpack.c.l.b16 %v1315
        %v1604 = vunpack.c.l.b16 %v1316
        %v1605 = vunpack.c.l.b16 %v1317
        %v1606 = vunpack.c.l.b16 %v1318
        %v1607 = vunpack.c.l.b16 %v1319
        %v1608 = vunpack.c.l.b16 %v1320
        %v1609 = vunpack.c.l.b16 %v1321
        %v1610 = vunpack.c.l.b16 %v1322
        %v1611 = vunpack.c.l.b16 %v1323
        %v1612 = vunpack.c.l.b16 %v1324
        %v1613 = vunpack.c.l.b16 %v1325
        %v1614 = vunpack.c.l.b16 %v1326
        %v1615 = vunpack.c.l.b16 %v1327
        %v1616 = vunpack.c.l.b16 %v1328
        %v1617 = vunpack.c.l.b16 %v1329
        %v1618 = vunpack.c.l.b16 %v1330
        %v1619 = vunpack.c.l.b16 %v1331
        %v1620 = vunpack.c.l.b16 %v1332
        %v1621 = vunpack.c.l.b16 %v1333
        %v1622 = vunpack.c.l.b16 %v1334
        %v1623 = vunpack.c.l.b16 %v1335
        %v1624 = vunpack.c.l.b16 %v1336
        %v1625 = vunpack.c.l.b16 %v1337
        %v1626 = vunpack.c.l.b16 %v1338
        %v1627 = vunpack.c.l.b16 %v1339
        %v1628 = vunpack.c.l.b16 %v1340
        %v1629 = vunpack.c.l.b16 %v1341
        %v1630 = vunpack.c.l.b16 %v1342
        %v1631 = vunpack.c.l.b16 %v1343
        %v1632 = vunpack.c.l.b16 %v1344
        %v1633 = vunpack.c.l.b16 %v1345
        %v1634 = vunpack.c.l.b16 %v1346
        %v1635 = vunpack.c.l.b16 %v1347
        %v1636 = vunpack.c.l.b16 %v1348
        %v1637 = vunpack.c.l.b16 %v1349
        %v1638 = vunpack.c.l.b16 %v1350
        %v1639 = vunpack.c.l.b16 %v1351
        %v1640 = vunpack.c.l.b16 %v1352
        %v1641 = vunpack.c.l.b16 %v1353
        %v1642 = vunpack.c.l.b16 %v1354
        %v1643 = vunpack.c.l.b16 %v1355
        %v1644 = vunpack.c.l.b16 %v1356
        %v1645 = vunpack.c.l.b16 %v1357
        %v1646 = vunpack.c.l.b16 %v1358
        %v1647 = vunpack.c.l.b16 %v1359
        %v1648 = vunpack.c.l.b16 %v1360
        %v1649 = vunpack.c.l.b16 %v1361
        %v1650 = vunpack.c.l.b16 %v1362
        %v1651 = vunpack.c.l.b16 %v1363
        %v1652 = vunpack.c.l.b16 %v1364
        %v1653 = vunpack.c.l.b16 %v1365
        %v1654 = vunpack.c.l.b16 %v1366
        %v1655 = vunpack.c.l.b16 %v1367
        %v1656 = vunpack.c.l.b16 %v1368
        %v1657 = vunpack.c.l.b16 %v1369
        %v1658 = vunpack.c.l.b16 %v1370
        %v1659 = vunpack.c.l.b16 %v1371
        %v1660 = vunpack.c.l.b16 %v1372
        %v1661 = vunpack.c.l.b16 %v1373
        %v1662 = vunpack.c.l.b16 %v1374
        %v1663 = vunpack.c.l.b16 %v1375
        %v1664 = vunpack.c.l.b16 %v1376
        %v1665 = vunpack.c.l.b16 %v1377
        %v1666 = vunpack.c.l.b16 %v1378
        %v1667 = vunpack.c.l.b16 %v1379
        %v1668 = vunpack.c.l.b16 %v1380
        %v1669 = vunpack.c.l.b16 %v1381
        %v1670 = vunpack.c.l.b16 %v1382
        %v1671 = vunpack.c.l.b16 %v1383
        %v1672 = vunpack.c.l.b16 %v1384
        %v1673 = vunpack.c.l.b16 %v1385
        %v1674 = vunpack.c.l.b16 %v1386
        %v1675 = vunpack.c.l.b16 %v1387
        %v1676 = vunpack.c.l.b16 %v1388
        %v1677 = vunpack.c.l.b16 %v1389
        %v1678 = vunpack.c.l.b16 %v1390
        %v1679 = vunpack.c.l.b16 %v1391
        %v1680 = vunpack.c.l.b16 %v1392
        %v1681 = vunpack.c.l.b16 %v1393
        %v1682 = vunpack.c.l.b16 %v1394
        %v1683 = vunpack.c.l.b16 %v1395
        %v1684 = vunpack.c.l.b16 %v1396
        %v1685 = vunpack.c.l.b16 %v1397
        %v1686 = vunpack.c.l.b16 %v1398
        %v1687 = vunpack.c.l.b16 %v1399
        %v1688 = vunpack.c.l.b16 %v1400
        %v1689 = vunpack.c.l.b16 %v1401
        %v1690 = vunpack.c.l.b16 %v1402
        %v1691 = vunpack.c.l.b16 %v1403
        %v1692 = vunpack.c.l.b16 %v1404
        %v1693 = vunpack.c.l.b16 %v1405
        %v1694 = vunpack.c.l.b16 %v1406
        %v1695 = vunpack.c.l.b16 %v1407
        %v1696 = vunpack.c.l.b16 %v1408
        %v1697 = vunpack.c.l.b16 %v1409
        %v1698 = vunpack.c.l.b16 %v1410
        %v1699 = vunpack.c.l.b16 %v1411
        %v1700 = vunpack.c.l.b16 %v1412
        %v1701 = vunpack.c.l.b16 %v1413
        %v1702 = vunpack.c.l.b16 %v1414
        %v1703 = vunpack.c.l.b16 %v1415
        %v1704 = vunpack.c.l.b16 %v1416
        %v1705 = vunpack.c.l.b16 %v1417
        %v1706 = vunpack.c.l.b16 %v1418
        %v1707 = vunpack.c.l.b16 %v1419
        %v1708 = vunpack.c.l.b16 %v1420
        %v1709 = vunpack.c.l.b16 %v1421
        %v1710 = vunpack.c.l.b16 %v1422
        %v1711 = vunpack.c.l.b16 %v1423
        %v1712 = vunpack.c.l.b16 %v1424
        %v1713 = vunpack.c.l.b16 %v1425
        %v1714 = vunpack.c.l.b16 %v1426
        %v1715 = vunpack.c.l.b16 %v1427
        %v1716 = vunpack.c.l.b16 %v1428
        %v1717 = vunpack.c.l.b16 %v1429
        %v1718 = vunpack.c.l.b16 %v1430
        %v1719 = vunpack.c.l.b16 %v1431
        %v1720 = vunpack.c.l.b16 %v1432
        %v1721 = vunpack.c.l.b16 %v1433
        %v1722 = vpack.c.b16 %v1579, %v1578
        %v1723 = vpack.c.b16 %v1581, %v1580
        %v1724 = vpack.c.b16 %v1583, %v1582
        %v1725 = vpack.c.b16 %v1585, %v1584
        %v1726 = vpack.c.b16 %v1587, %v1586
        %v1727 = vpack.c.b16 %v1589, %v1588
        %v1728 = vpack.c.b16 %v1591, %v1590
        %v1729 = vpack.c.b16 %v1593, %v1592
        %v1730 = vpack.c.b16 %v1595, %v1594
        %v1731 = vpack.c.b16 %v1597, %v1596
        %v1732 = vpack.c.b16 %v1599, %v1598
        %v1733 = vpack.c.b16 %v1601, %v1600
        %v1734 = vpack.c.b16 %v1603, %v1602
        %v1735 = vpack.c.b16 %v1605, %v1604
        %v1736 = vpack.c.b16 %v1607, %v1606
        %v1737 = vpack.c.b16 %v1609, %v1608
        %v1738 = vpack.c.b16 %v1611, %v1610
        %v1739 = vpack.c.b16 %v1613, %v1612
        %v1740 = vpack.c.b16 %v1615, %v1614
        %v1741 = vpack.c.b16 %v1617, %v1616
        %v1742 = vpack.c.b16 %v1619, %v1618
        %v1743 = vpack.c.b16 %v1621, %v1620
        %v1744 = vpack.c.b16 %v1623, %v1622
        %v1745 = vpack.c.b16 %v1625, %v1624
        %v1746 = vpack.c.b16 %v1627, %v1626
        %v1747 = vpack.c.b16 %v1629, %v1628
        %v1748 = vpack.c.b16 %v1631, %v1630
        %v1749 = vpack.c.b16 %v1633, %v1632
        %v1750 = vpack.c.b16 %v1635, %v1634
        %v1751 = vpack.c.b16 %v1637, %v1636
        %v1752 = vpack.c.b16 %v1639, %v1638
        %v1753 = vpack.c.b16 %v1641, %v1640
        %v1754 = vpack.c.b16 %v1643, %v1642
        %v1755 = vpack.c.b16 %v1645, %v1644
        %v1756 = vpack.c.b16 %v1647, %v1646
        %v1757 = vpack.c.b16 %v1649, %v1648
        %v1758 = vpack.c.b16 %v1651, %v1650
        %v1759 = vpack.c.b16 %v1653, %v1652
        %v1760 = vpack.c.b16 %v1655, %v1654
        %v1761 = vpack.c.b16 %v1657, %v1656
        %v1762 = vpack.c.b16 %v1659, %v1658
        %v1763 = vpack.c.b16 %v1661, %v1660
        %v1764 = vpack.c.b16 %v1663, %v1662
        %v1765 = vpack.c.b16 %v1665, %v1664
        %v1766 = vpack.c.b16 %v1667, %v1666
        %v1767 = vpack.c.b16 %v1669, %v1668
        %v1768 = vpack.c.b16 %v1671, %v1670
        %v1769 = vpack.c.b16 %v1673, %v1672
        %v1770 = vpack.c.b16 %v1675, %v1674
        %v1771 = vpack.c.b16 %v1677, %v1676
        %v1772 = vpack.c.b16 %v1679, %v1678
        %v1773 = vpack.c.b16 %v1681, %v1680
        %v1774 = vpack.c.b16 %v1683, %v1682
        %v1775 = vpack.c.b16 %v1685, %v1684
        %v1776 = vpack.c.b16 %v1687, %v1686
        %v1777 = vpack.c.b16 %v1689, %v1688
        %v1778 = vpack.c.b16 %v1691, %v1690
        %v1779 = vpack.c.b16 %v1693, %v1692
        %v1780 = vpack.c.b16 %v1695, %v1694
        %v1781 = vpack.c.b16 %v1697, %v1696
        %v1782 = vpack.c.b16 %v1699, %v1698
        %v1783 = vpack.c.b16 %v1701, %v1700
        %v1784 = vpack.c.b16 %v1703, %v1702
        %v1785 = vpack.c.b16 %v1705, %v1704
        %v1786 = vpack.c.b16 %v1707, %v1706
        %v1787 = vpack.c.b16 %v1709, %v1708
        %v1788 = vpack.c.b16 %v1711, %v1710
        %v1789 = vpack.c.b16 %v1713, %v1712
        %v1790 = vpack.c.b16 %v1715, %v1714
        %v1791 = vpack.c.b16 %v1717, %v1716
        %v1792 = vpack.c.b16 %v1719, %v1718
        %v1793 = vpack.c.b16 %v1721, %v1720
        %1866 = vmatpush.bf16.msra.mxu0 %v1729
        %1867 = vmatpush.bf16.msra.mxu0 %v1728
        %1868 = vmatpush.bf16.msra.mxu0 %v1727
        %1869 = vmatpush.bf16.msra.mxu0 %v1726
        %1870 = vmatpush.bf16.msra.mxu0 %v1725
        %1871 = vmatpush.bf16.msra.mxu0 %v1724
        %1872 = vmatpush.bf16.msra.mxu0 %v1723
        %1873 = vmatpush.bf16.msra.mxu0 %v1722
        %1874 = vmatmul.bf16.gmra.mxu0 %v931
        %v1875 = vpop.f32.mrf.mxu0
        %v1876 = vadd.f32 0.0, %v1875
        %v1877 = vpop.f32.mrf.mxu0
        %v1878 = vadd.f32 0.0, %v1877
        %1879 = vmatmul.bf16.gmra.mxu0 %v932
        %v1880 = vpop.f32.mrf.mxu0
        %v1881 = vadd.f32 0.0, %v1880
        %v1882 = vpop.f32.mrf.mxu0
        %v1883 = vadd.f32 0.0, %v1882
        %1884 = vmatmul.bf16.gmra.mxu0 %v933
        %v1885 = vpop.f32.mrf.mxu0
        %v1886 = vadd.f32 0.0, %v1885
        %v1887 = vpop.f32.mrf.mxu0
        %v1888 = vadd.f32 0.0, %v1887
        %1889 = vmatmul.bf16.gmra.mxu0 %v934
        %v1890 = vpop.f32.mrf.mxu0
        %v1891 = vadd.f32 0.0, %v1890
        %v1892 = vpop.f32.mrf.mxu0
        %v1893 = vadd.f32 0.0, %v1892
        %1894 = vmatmul.bf16.gmra.mxu0 %v935
        %v1895 = vpop.f32.mrf.mxu0
        %v1896 = vadd.f32 0.0, %v1895
        %v1897 = vpop.f32.mrf.mxu0
        %v1898 = vadd.f32 0.0, %v1897
        %1899 = vmatmul.bf16.gmra.mxu0 %v936
        %v1900 = vpop.f32.mrf.mxu0
        %v1901 = vadd.f32 0.0, %v1900
        %v1902 = vpop.f32.mrf.mxu0
        %v1903 = vadd.f32 0.0, %v1902
        %1904 = vmatmul.bf16.gmra.mxu0 %v937
        %v1905 = vpop.f32.mrf.mxu0
        %v1906 = vadd.f32 0.0, %v1905
        %v1907 = vpop.f32.mrf.mxu0
        %v1908 = vadd.f32 0.0, %v1907
        %1909 = vmatmul.bf16.gmra.mxu0 %v938
        %v1910 = vpop.f32.mrf.mxu0
        %v1911 = vadd.f32 0.0, %v1910
        %v1912 = vpop.f32.mrf.mxu0
        %v1913 = vadd.f32 0.0, %v1912
        %1914 = vmatmul.bf16.gmra.mxu0 %v939
        %v1915 = vpop.f32.mrf.mxu0
        %v1916 = vadd.f32 0.0, %v1915
        %v1917 = vpop.f32.mrf.mxu0
        %v1918 = vadd.f32 0.0, %v1917
        %1919 = vmatmul.bf16.gmra.mxu0 %v940
        %v1920 = vpop.f32.mrf.mxu0
        %v1921 = vadd.f32 0.0, %v1920
        %v1922 = vpop.f32.mrf.mxu0
        %v1923 = vadd.f32 0.0, %v1922
        %1924 = vmatmul.bf16.gmra.mxu0 %v941
        %v1925 = vpop.f32.mrf.mxu0
        %v1926 = vadd.f32 0.0, %v1925
        %v1927 = vpop.f32.mrf.mxu0
        %v1928 = vadd.f32 0.0, %v1927
        %1929 = vmatmul.bf16.gmra.mxu0 %v942
        %v1930 = vpop.f32.mrf.mxu0
        %v1931 = vadd.f32 0.0, %v1930
        %v1932 = vpop.f32.mrf.mxu0
        %v1933 = vadd.f32 0.0, %v1932
        %1934 = vmatmul.bf16.gmra.mxu0 %v943
        %v1935 = vpop.f32.mrf.mxu0
        %v1936 = vadd.f32 0.0, %v1935
        %v1937 = vpop.f32.mrf.mxu0
        %v1938 = vadd.f32 0.0, %v1937
        %1939 = vmatmul.bf16.gmra.mxu0 %v944
        %v1940 = vpop.f32.mrf.mxu0
        %v1941 = vadd.f32 0.0, %v1940
        %v1942 = vpop.f32.mrf.mxu0
        %v1943 = vadd.f32 0.0, %v1942
        %1944 = vmatmul.bf16.gmra.mxu0 %v945
        %v1945 = vpop.f32.mrf.mxu0
        %v1946 = vadd.f32 0.0, %v1945
        %v1947 = vpop.f32.mrf.mxu0
        %v1948 = vadd.f32 0.0, %v1947
        %1949 = vmatmul.bf16.gmra.mxu0 %v946
        %v1950 = vpop.f32.mrf.mxu0
        %v1951 = vadd.f32 0.0, %v1950
        %v1952 = vpop.f32.mrf.mxu0
        %v1953 = vadd.f32 0.0, %v1952
        %1954 = vdwg.mxu0
        %1955 = vmatpush.bf16.msra.mxu0 %v1737
        %1956 = vmatpush.bf16.msra.mxu0 %v1736
        %1957 = vmatpush.bf16.msra.mxu0 %v1735
        %1958 = vmatpush.bf16.msra.mxu0 %v1734
        %1959 = vmatpush.bf16.msra.mxu0 %v1733
        %1960 = vmatpush.bf16.msra.mxu0 %v1732
        %1961 = vmatpush.bf16.msra.mxu0 %v1731
        %1962 = vmatpush.bf16.msra.mxu0 %v1730
        %1963 = vmatmul.bf16.gmra.mxu0 %v977
        %v1964 = vpop.f32.mrf.mxu0
        %v1965 = vadd.f32 %v1876, %v1964
        %v1966 = vpop.f32.mrf.mxu0
        %v1967 = vadd.f32 %v1878, %v1966
        %1968 = vmatmul.bf16.gmra.mxu0 %v989
        %v1969 = vpop.f32.mrf.mxu0
        %v1970 = vadd.f32 %v1881, %v1969
        %v1971 = vpop.f32.mrf.mxu0
        %v1972 = vadd.f32 %v1883, %v1971
        %1973 = vmatmul.bf16.gmra.mxu0 %v1001
        %v1974 = vpop.f32.mrf.mxu0
        %v1975 = vadd.f32 %v1886, %v1974
        %v1976 = vpop.f32.mrf.mxu0
        %v1977 = vadd.f32 %v1888, %v1976
        %1978 = vmatmul.bf16.gmra.mxu0 %v1013
        %v1979 = vpop.f32.mrf.mxu0
        %v1980 = vadd.f32 %v1891, %v1979
        %v1981 = vpop.f32.mrf.mxu0
        %v1982 = vadd.f32 %v1893, %v1981
        %1983 = vmatmul.bf16.gmra.mxu0 %v1025
        %v1984 = vpop.f32.mrf.mxu0
        %v1985 = vadd.f32 %v1896, %v1984
        %v1986 = vpop.f32.mrf.mxu0
        %v1987 = vadd.f32 %v1898, %v1986
        %1988 = vmatmul.bf16.gmra.mxu0 %v1037
        %v1989 = vpop.f32.mrf.mxu0
        %v1990 = vadd.f32 %v1901, %v1989
        %v1991 = vpop.f32.mrf.mxu0
        %v1992 = vadd.f32 %v1903, %v1991
        %1993 = vmatmul.bf16.gmra.mxu0 %v1049
        %v1994 = vpop.f32.mrf.mxu0
        %v1995 = vadd.f32 %v1906, %v1994
        %v1996 = vpop.f32.mrf.mxu0
        %v1997 = vadd.f32 %v1908, %v1996
        %1998 = vmatmul.bf16.gmra.mxu0 %v1061
        %v1999 = vpop.f32.mrf.mxu0
        %v2000 = vadd.f32 %v1911, %v1999
        %v2001 = vpop.f32.mrf.mxu0
        %v2002 = vadd.f32 %v1913, %v2001
        %2003 = vmatmul.bf16.gmra.mxu0 %v1073
        %v2004 = vpop.f32.mrf.mxu0
        %v2005 = vadd.f32 %v1916, %v2004
        %v2006 = vpop.f32.mrf.mxu0
        %v2007 = vadd.f32 %v1918, %v2006
        %2008 = vmatmul.bf16.gmra.mxu0 %v1085
        %v2009 = vpop.f32.mrf.mxu0
        %v2010 = vadd.f32 %v1921, %v2009
        %v2011 = vpop.f32.mrf.mxu0
        %v2012 = vadd.f32 %v1923, %v2011
        %2013 = vmatmul.bf16.gmra.mxu0 %v1097
        %v2014 = vpop.f32.mrf.mxu0
        %v2015 = vadd.f32 %v1926, %v2014
        %v2016 = vpop.f32.mrf.mxu0
        %v2017 = vadd.f32 %v1928, %v2016
        %2018 = vmatmul.bf16.gmra.mxu0 %v1109
        %v2019 = vpop.f32.mrf.mxu0
        %v2020 = vadd.f32 %v1931, %v2019
        %v2021 = vpop.f32.mrf.mxu0
        %v2022 = vadd.f32 %v1933, %v2021
        %2023 = vmatmul.bf16.gmra.mxu0 %v1121
        %v2024 = vpop.f32.mrf.mxu0
        %v2025 = vadd.f32 %v1936, %v2024
        %v2026 = vpop.f32.mrf.mxu0
        %v2027 = vadd.f32 %v1938, %v2026
        %2028 = vmatmul.bf16.gmra.mxu0 %v1133
        %v2029 = vpop.f32.mrf.mxu0
        %v2030 = vadd.f32 %v1941, %v2029
        %v2031 = vpop.f32.mrf.mxu0
        %v2032 = vadd.f32 %v1943, %v2031
        %2033 = vmatmul.bf16.gmra.mxu0 %v1145
        %v2034 = vpop.f32.mrf.mxu0
        %v2035 = vadd.f32 %v1946, %v2034
        %v2036 = vpop.f32.mrf.mxu0
        %v2037 = vadd.f32 %v1948, %v2036
        %2038 = vmatmul.bf16.gmra.mxu0 %v1157
        %v2039 = vpop.f32.mrf.mxu0
        %v2040 = vadd.f32 %v1951, %v2039
        %v2041 = vpop.f32.mrf.mxu0
        %v2042 = vadd.f32 %v1953, %v2041
        %2043 = vdwg.mxu0
        %2044 = vmatpush.bf16.msra.mxu0 %v1745
        %2045 = vmatpush.bf16.msra.mxu0 %v1744
        %2046 = vmatpush.bf16.msra.mxu0 %v1743
        %2047 = vmatpush.bf16.msra.mxu0 %v1742
        %2048 = vmatpush.bf16.msra.mxu0 %v1741
        %2049 = vmatpush.bf16.msra.mxu0 %v1740
        %2050 = vmatpush.bf16.msra.mxu0 %v1739
        %2051 = vmatpush.bf16.msra.mxu0 %v1738
        %2052 = vmatmul.bf16.gmra.mxu0 %v1209
        %v2053 = vpop.f32.mrf.mxu0
        %v2054 = vadd.f32 %v1965, %v2053
        %v2055 = vpop.f32.mrf.mxu0
        %v2056 = vadd.f32 %v1967, %v2055
        %2057 = vmatmul.bf16.gmra.mxu0 %v1212
        %v2058 = vpop.f32.mrf.mxu0
        %v2059 = vadd.f32 %v1970, %v2058
        %v2060 = vpop.f32.mrf.mxu0
        %v2061 = vadd.f32 %v1972, %v2060
        %2062 = vmatmul.bf16.gmra.mxu0 %v1215
        %v2063 = vpop.f32.mrf.mxu0
        %v2064 = vadd.f32 %v1975, %v2063
        %v2065 = vpop.f32.mrf.mxu0
        %v2066 = vadd.f32 %v1977, %v2065
        %2067 = vmatmul.bf16.gmra.mxu0 %v1218
        %v2068 = vpop.f32.mrf.mxu0
        %v2069 = vadd.f32 %v1980, %v2068
        %v2070 = vpop.f32.mrf.mxu0
        %v2071 = vadd.f32 %v1982, %v2070
        %2072 = vmatmul.bf16.gmra.mxu0 %v1221
        %v2073 = vpop.f32.mrf.mxu0
        %v2074 = vadd.f32 %v1985, %v2073
        %v2075 = vpop.f32.mrf.mxu0
        %v2076 = vadd.f32 %v1987, %v2075
        %2077 = vmatmul.bf16.gmra.mxu0 %v1224
        %v2078 = vpop.f32.mrf.mxu0
        %v2079 = vadd.f32 %v1990, %v2078
        %v2080 = vpop.f32.mrf.mxu0
        %v2081 = vadd.f32 %v1992, %v2080
        %2082 = vmatmul.bf16.gmra.mxu0 %v1227
        %v2083 = vpop.f32.mrf.mxu0
        %v2084 = vadd.f32 %v1995, %v2083
        %v2085 = vpop.f32.mrf.mxu0
        %v2086 = vadd.f32 %v1997, %v2085
        %2087 = vmatmul.bf16.gmra.mxu0 %v1230
        %v2088 = vpop.f32.mrf.mxu0
        %v2089 = vadd.f32 %v2000, %v2088
        %v2090 = vpop.f32.mrf.mxu0
        %v2091 = vadd.f32 %v2002, %v2090
        %2092 = vmatmul.bf16.gmra.mxu0 %v1233
        %v2093 = vpop.f32.mrf.mxu0
        %v2094 = vadd.f32 %v2005, %v2093
        %v2095 = vpop.f32.mrf.mxu0
        %v2096 = vadd.f32 %v2007, %v2095
        %2097 = vmatmul.bf16.gmra.mxu0 %v1236
        %v2098 = vpop.f32.mrf.mxu0
        %v2099 = vadd.f32 %v2010, %v2098
        %v2100 = vpop.f32.mrf.mxu0
        %v2101 = vadd.f32 %v2012, %v2100
        %2102 = vmatmul.bf16.gmra.mxu0 %v1239
        %v2103 = vpop.f32.mrf.mxu0
        %v2104 = vadd.f32 %v2015, %v2103
        %v2105 = vpop.f32.mrf.mxu0
        %v2106 = vadd.f32 %v2017, %v2105
        %2107 = vmatmul.bf16.gmra.mxu0 %v1242
        %v2108 = vpop.f32.mrf.mxu0
        %v2109 = vadd.f32 %v2020, %v2108
        %v2110 = vpop.f32.mrf.mxu0
        %v2111 = vadd.f32 %v2022, %v2110
        %2112 = vmatmul.bf16.gmra.mxu0 %v1245
        %v2113 = vpop.f32.mrf.mxu0
        %v2114 = vadd.f32 %v2025, %v2113
        %v2115 = vpop.f32.mrf.mxu0
        %v2116 = vadd.f32 %v2027, %v2115
        %2117 = vmatmul.bf16.gmra.mxu0 %v1248
        %v2118 = vpop.f32.mrf.mxu0
        %v2119 = vadd.f32 %v2030, %v2118
        %v2120 = vpop.f32.mrf.mxu0
        %v2121 = vadd.f32 %v2032, %v2120
        %2122 = vmatmul.bf16.gmra.mxu0 %v1251
        %v2123 = vpop.f32.mrf.mxu0
        %v2124 = vadd.f32 %v2035, %v2123
        %v2125 = vpop.f32.mrf.mxu0
        %v2126 = vadd.f32 %v2037, %v2125
        %2127 = vmatmul.bf16.gmra.mxu0 %v1254
        %v2128 = vpop.f32.mrf.mxu0
        %v2129 = vadd.f32 %v2040, %v2128
        %v2130 = vpop.f32.mrf.mxu0
        %v2131 = vadd.f32 %v2042, %v2130
        %2132 = vdwg.mxu0
        %2133 = vmatpush.bf16.msra.mxu0 %v1753
        %2134 = vmatpush.bf16.msra.mxu0 %v1752
        %2135 = vmatpush.bf16.msra.mxu0 %v1751
        %2136 = vmatpush.bf16.msra.mxu0 %v1750
        %2137 = vmatpush.bf16.msra.mxu0 %v1749
        %2138 = vmatpush.bf16.msra.mxu0 %v1748
        %2139 = vmatpush.bf16.msra.mxu0 %v1747
        %2140 = vmatpush.bf16.msra.mxu0 %v1746
        %2141 = vmatmul.bf16.gmra.mxu0 %v932
        %v2142 = vpop.f32.mrf.mxu0
        %v2143 = vadd.f32 %v2054, %v2142
        %v2144 = vpop.f32.mrf.mxu0
        %v2145 = vadd.f32 %v2056, %v2144
        %2146 = vmatmul.bf16.gmra.mxu0 %v933
        %v2147 = vpop.f32.mrf.mxu0
        %v2148 = vadd.f32 %v2059, %v2147
        %v2149 = vpop.f32.mrf.mxu0
        %v2150 = vadd.f32 %v2061, %v2149
        %2151 = vmatmul.bf16.gmra.mxu0 %v934
        %v2152 = vpop.f32.mrf.mxu0
        %v2153 = vadd.f32 %v2064, %v2152
        %v2154 = vpop.f32.mrf.mxu0
        %v2155 = vadd.f32 %v2066, %v2154
        %2156 = vmatmul.bf16.gmra.mxu0 %v935
        %v2157 = vpop.f32.mrf.mxu0
        %v2158 = vadd.f32 %v2069, %v2157
        %v2159 = vpop.f32.mrf.mxu0
        %v2160 = vadd.f32 %v2071, %v2159
        %2161 = vmatmul.bf16.gmra.mxu0 %v936
        %v2162 = vpop.f32.mrf.mxu0
        %v2163 = vadd.f32 %v2074, %v2162
        %v2164 = vpop.f32.mrf.mxu0
        %v2165 = vadd.f32 %v2076, %v2164
        %2166 = vmatmul.bf16.gmra.mxu0 %v937
        %v2167 = vpop.f32.mrf.mxu0
        %v2168 = vadd.f32 %v2079, %v2167
        %v2169 = vpop.f32.mrf.mxu0
        %v2170 = vadd.f32 %v2081, %v2169
        %2171 = vmatmul.bf16.gmra.mxu0 %v938
        %v2172 = vpop.f32.mrf.mxu0
        %v2173 = vadd.f32 %v2084, %v2172
        %v2174 = vpop.f32.mrf.mxu0
        %v2175 = vadd.f32 %v2086, %v2174
        %2176 = vmatmul.bf16.gmra.mxu0 %v939
        %v2177 = vpop.f32.mrf.mxu0
        %v2178 = vadd.f32 %v2089, %v2177
        %v2179 = vpop.f32.mrf.mxu0
        %v2180 = vadd.f32 %v2091, %v2179
        %2181 = vmatmul.bf16.gmra.mxu0 %v940
        %v2182 = vpop.f32.mrf.mxu0
        %v2183 = vadd.f32 %v2094, %v2182
        %v2184 = vpop.f32.mrf.mxu0
        %v2185 = vadd.f32 %v2096, %v2184
        %2186 = vmatmul.bf16.gmra.mxu0 %v941
        %v2187 = vpop.f32.mrf.mxu0
        %v2188 = vadd.f32 %v2099, %v2187
        %v2189 = vpop.f32.mrf.mxu0
        %v2190 = vadd.f32 %v2101, %v2189
        %2191 = vmatmul.bf16.gmra.mxu0 %v942
        %v2192 = vpop.f32.mrf.mxu0
        %v2193 = vadd.f32 %v2104, %v2192
        %v2194 = vpop.f32.mrf.mxu0
        %v2195 = vadd.f32 %v2106, %v2194
        %2196 = vmatmul.bf16.gmra.mxu0 %v943
        %v2197 = vpop.f32.mrf.mxu0
        %v2198 = vadd.f32 %v2109, %v2197
        %v2199 = vpop.f32.mrf.mxu0
        %v2200 = vadd.f32 %v2111, %v2199
        %2201 = vmatmul.bf16.gmra.mxu0 %v944
        %v2202 = vpop.f32.mrf.mxu0
        %v2203 = vadd.f32 %v2114, %v2202
        %v2204 = vpop.f32.mrf.mxu0
        %v2205 = vadd.f32 %v2116, %v2204
        %2206 = vmatmul.bf16.gmra.mxu0 %v945
        %v2207 = vpop.f32.mrf.mxu0
        %v2208 = vadd.f32 %v2119, %v2207
        %v2209 = vpop.f32.mrf.mxu0
        %v2210 = vadd.f32 %v2121, %v2209
        %2211 = vmatmul.bf16.gmra.mxu0 %v946
        %v2212 = vpop.f32.mrf.mxu0
        %v2213 = vadd.f32 %v2124, %v2212
        %v2214 = vpop.f32.mrf.mxu0
        %v2215 = vadd.f32 %v2126, %v2214
        %2216 = vmatmul.bf16.gmra.mxu0 %v947
        %v2217 = vpop.f32.mrf.mxu0
        %v2218 = vadd.f32 %v2129, %v2217
        %v2219 = vpop.f32.mrf.mxu0
        %v2220 = vadd.f32 %v2131, %v2219
        %2221 = vdwg.mxu0
        %2222 = vmatpush.bf16.msra.mxu0 %v1761
        %2223 = vmatpush.bf16.msra.mxu0 %v1760
        %2224 = vmatpush.bf16.msra.mxu0 %v1759
        %2225 = vmatpush.bf16.msra.mxu0 %v1758
        %2226 = vmatpush.bf16.msra.mxu0 %v1757
        %2227 = vmatpush.bf16.msra.mxu0 %v1756
        %2228 = vmatpush.bf16.msra.mxu0 %v1755
        %2229 = vmatpush.bf16.msra.mxu0 %v1754
        %2230 = vmatmul.bf16.gmra.mxu0 %v989
        %v2231 = vpop.f32.mrf.mxu0
        %v2232 = vadd.f32 %v2143, %v2231
        %v2233 = vpop.f32.mrf.mxu0
        %v2234 = vadd.f32 %v2145, %v2233
        %2235 = vmatmul.bf16.gmra.mxu0 %v1001
        %v2236 = vpop.f32.mrf.mxu0
        %v2237 = vadd.f32 %v2148, %v2236
        %v2238 = vpop.f32.mrf.mxu0
        %v2239 = vadd.f32 %v2150, %v2238
        %2240 = vmatmul.bf16.gmra.mxu0 %v1013
        %v2241 = vpop.f32.mrf.mxu0
        %v2242 = vadd.f32 %v2153, %v2241
        %v2243 = vpop.f32.mrf.mxu0
        %v2244 = vadd.f32 %v2155, %v2243
        %2245 = vmatmul.bf16.gmra.mxu0 %v1025
        %v2246 = vpop.f32.mrf.mxu0
        %v2247 = vadd.f32 %v2158, %v2246
        %v2248 = vpop.f32.mrf.mxu0
        %v2249 = vadd.f32 %v2160, %v2248
        %2250 = vmatmul.bf16.gmra.mxu0 %v1037
        %v2251 = vpop.f32.mrf.mxu0
        %v2252 = vadd.f32 %v2163, %v2251
        %v2253 = vpop.f32.mrf.mxu0
        %v2254 = vadd.f32 %v2165, %v2253
        %2255 = vmatmul.bf16.gmra.mxu0 %v1049
        %v2256 = vpop.f32.mrf.mxu0
        %v2257 = vadd.f32 %v2168, %v2256
        %v2258 = vpop.f32.mrf.mxu0
        %v2259 = vadd.f32 %v2170, %v2258
        %2260 = vmatmul.bf16.gmra.mxu0 %v1061
        %v2261 = vpop.f32.mrf.mxu0
        %v2262 = vadd.f32 %v2173, %v2261
        %v2263 = vpop.f32.mrf.mxu0
        %v2264 = vadd.f32 %v2175, %v2263
        %2265 = vmatmul.bf16.gmra.mxu0 %v1073
        %v2266 = vpop.f32.mrf.mxu0
        %v2267 = vadd.f32 %v2178, %v2266
        %v2268 = vpop.f32.mrf.mxu0
        %v2269 = vadd.f32 %v2180, %v2268
        %2270 = vmatmul.bf16.gmra.mxu0 %v1085
        %v2271 = vpop.f32.mrf.mxu0
        %v2272 = vadd.f32 %v2183, %v2271
        %v2273 = vpop.f32.mrf.mxu0
        %v2274 = vadd.f32 %v2185, %v2273
        %2275 = vmatmul.bf16.gmra.mxu0 %v1097
        %v2276 = vpop.f32.mrf.mxu0
        %v2277 = vadd.f32 %v2188, %v2276
        %v2278 = vpop.f32.mrf.mxu0
        %v2279 = vadd.f32 %v2190, %v2278
        %2280 = vmatmul.bf16.gmra.mxu0 %v1109
        %v2281 = vpop.f32.mrf.mxu0
        %v2282 = vadd.f32 %v2193, %v2281
        %v2283 = vpop.f32.mrf.mxu0
        %v2284 = vadd.f32 %v2195, %v2283
        %2285 = vmatmul.bf16.gmra.mxu0 %v1121
        %v2286 = vpop.f32.mrf.mxu0
        %v2287 = vadd.f32 %v2198, %v2286
        %v2288 = vpop.f32.mrf.mxu0
        %v2289 = vadd.f32 %v2200, %v2288
        %2290 = vmatmul.bf16.gmra.mxu0 %v1133
        %v2291 = vpop.f32.mrf.mxu0
        %v2292 = vadd.f32 %v2203, %v2291
        %v2293 = vpop.f32.mrf.mxu0
        %v2294 = vadd.f32 %v2205, %v2293
        %2295 = vmatmul.bf16.gmra.mxu0 %v1145
        %v2296 = vpop.f32.mrf.mxu0
        %v2297 = vadd.f32 %v2208, %v2296
        %v2298 = vpop.f32.mrf.mxu0
        %v2299 = vadd.f32 %v2210, %v2298
        %2300 = vmatmul.bf16.gmra.mxu0 %v1157
        %v2301 = vpop.f32.mrf.mxu0
        %v2302 = vadd.f32 %v2213, %v2301
        %v2303 = vpop.f32.mrf.mxu0
        %v2304 = vadd.f32 %v2215, %v2303
        %2305 = vmatmul.bf16.gmra.mxu0 %v1282
        %v2306 = vpop.f32.mrf.mxu0
        %v2307 = vadd.f32 %v2218, %v2306
        %v2308 = vpop.f32.mrf.mxu0
        %v2309 = vadd.f32 %v2220, %v2308
        %2310 = vdwg.mxu0
        %2311 = vmatpush.bf16.msra.mxu0 %v1769
        %2312 = vmatpush.bf16.msra.mxu0 %v1768
        %2313 = vmatpush.bf16.msra.mxu0 %v1767
        %2314 = vmatpush.bf16.msra.mxu0 %v1766
        %2315 = vmatpush.bf16.msra.mxu0 %v1765
        %2316 = vmatpush.bf16.msra.mxu0 %v1764
        %2317 = vmatpush.bf16.msra.mxu0 %v1763
        %2318 = vmatpush.bf16.msra.mxu0 %v1762
        %2319 = vmatmul.bf16.gmra.mxu0 %v1212
        %v2320 = vpop.f32.mrf.mxu0
        %v2321 = vadd.f32 %v2232, %v2320
        %v2322 = vpop.f32.mrf.mxu0
        %v2323 = vadd.f32 %v2234, %v2322
        %2324 = vmatmul.bf16.gmra.mxu0 %v1215
        %v2325 = vpop.f32.mrf.mxu0
        %v2326 = vadd.f32 %v2237, %v2325
        %v2327 = vpop.f32.mrf.mxu0
        %v2328 = vadd.f32 %v2239, %v2327
        %2329 = vmatmul.bf16.gmra.mxu0 %v1218
        %v2330 = vpop.f32.mrf.mxu0
        %v2331 = vadd.f32 %v2242, %v2330
        %v2332 = vpop.f32.mrf.mxu0
        %v2333 = vadd.f32 %v2244, %v2332
        %2334 = vmatmul.bf16.gmra.mxu0 %v1221
        %v2335 = vpop.f32.mrf.mxu0
        %v2336 = vadd.f32 %v2247, %v2335
        %v2337 = vpop.f32.mrf.mxu0
        %v2338 = vadd.f32 %v2249, %v2337
        %2339 = vmatmul.bf16.gmra.mxu0 %v1224
        %v2340 = vpop.f32.mrf.mxu0
        %v2341 = vadd.f32 %v2252, %v2340
        %v2342 = vpop.f32.mrf.mxu0
        %v2343 = vadd.f32 %v2254, %v2342
        %2344 = vmatmul.bf16.gmra.mxu0 %v1227
        %v2345 = vpop.f32.mrf.mxu0
        %v2346 = vadd.f32 %v2257, %v2345
        %v2347 = vpop.f32.mrf.mxu0
        %v2348 = vadd.f32 %v2259, %v2347
        %2349 = vmatmul.bf16.gmra.mxu0 %v1230
        %v2350 = vpop.f32.mrf.mxu0
        %v2351 = vadd.f32 %v2262, %v2350
        %v2352 = vpop.f32.mrf.mxu0
        %v2353 = vadd.f32 %v2264, %v2352
        %2354 = vmatmul.bf16.gmra.mxu0 %v1233
        %v2355 = vpop.f32.mrf.mxu0
        %v2356 = vadd.f32 %v2267, %v2355
        %v2357 = vpop.f32.mrf.mxu0
        %v2358 = vadd.f32 %v2269, %v2357
        %2359 = vmatmul.bf16.gmra.mxu0 %v1236
        %v2360 = vpop.f32.mrf.mxu0
        %v2361 = vadd.f32 %v2272, %v2360
        %v2362 = vpop.f32.mrf.mxu0
        %v2363 = vadd.f32 %v2274, %v2362
        %2364 = vmatmul.bf16.gmra.mxu0 %v1239
        %v2365 = vpop.f32.mrf.mxu0
        %v2366 = vadd.f32 %v2277, %v2365
        %v2367 = vpop.f32.mrf.mxu0
        %v2368 = vadd.f32 %v2279, %v2367
        %2369 = vmatmul.bf16.gmra.mxu0 %v1242
        %v2370 = vpop.f32.mrf.mxu0
        %v2371 = vadd.f32 %v2282, %v2370
        %v2372 = vpop.f32.mrf.mxu0
        %v2373 = vadd.f32 %v2284, %v2372
        %2374 = vmatmul.bf16.gmra.mxu0 %v1245
        %v2375 = vpop.f32.mrf.mxu0
        %v2376 = vadd.f32 %v2287, %v2375
        %v2377 = vpop.f32.mrf.mxu0
        %v2378 = vadd.f32 %v2289, %v2377
        %2379 = vmatmul.bf16.gmra.mxu0 %v1248
        %v2380 = vpop.f32.mrf.mxu0
        %v2381 = vadd.f32 %v2292, %v2380
        %v2382 = vpop.f32.mrf.mxu0
        %v2383 = vadd.f32 %v2294, %v2382
        %2384 = vmatmul.bf16.gmra.mxu0 %v1251
        %v2385 = vpop.f32.mrf.mxu0
        %v2386 = vadd.f32 %v2297, %v2385
        %v2387 = vpop.f32.mrf.mxu0
        %v2388 = vadd.f32 %v2299, %v2387
        %2389 = vmatmul.bf16.gmra.mxu0 %v1254
        %v2390 = vpop.f32.mrf.mxu0
        %v2391 = vadd.f32 %v2302, %v2390
        %v2392 = vpop.f32.mrf.mxu0
        %v2393 = vadd.f32 %v2304, %v2392
        %2394 = vmatmul.bf16.gmra.mxu0 %v1288
        %v2395 = vpop.f32.mrf.mxu0
        %v2396 = vadd.f32 %v2307, %v2395
        %v2397 = vpop.f32.mrf.mxu0
        %v2398 = vadd.f32 %v2309, %v2397
        %2399 = vdwg.mxu0
        %2400 = vmatpush.bf16.msra.mxu0 %v1777
        %2401 = vmatpush.bf16.msra.mxu0 %v1776
        %2402 = vmatpush.bf16.msra.mxu0 %v1775
        %2403 = vmatpush.bf16.msra.mxu0 %v1774
        %2404 = vmatpush.bf16.msra.mxu0 %v1773
        %2405 = vmatpush.bf16.msra.mxu0 %v1772
        %2406 = vmatpush.bf16.msra.mxu0 %v1771
        %2407 = vmatpush.bf16.msra.mxu0 %v1770
        %2408 = vmatmul.bf16.gmra.mxu0 %v933
        %v2409 = vpop.f32.mrf.mxu0
        %v2410 = vadd.f32 %v2321, %v2409
        %v2411 = vpop.f32.mrf.mxu0
        %v2412 = vadd.f32 %v2323, %v2411
        %2413 = vmatmul.bf16.gmra.mxu0 %v934
        %v2414 = vpop.f32.mrf.mxu0
        %v2415 = vadd.f32 %v2326, %v2414
        %v2416 = vpop.f32.mrf.mxu0
        %v2417 = vadd.f32 %v2328, %v2416
        %2418 = vmatmul.bf16.gmra.mxu0 %v935
        %v2419 = vpop.f32.mrf.mxu0
        %v2420 = vadd.f32 %v2331, %v2419
        %v2421 = vpop.f32.mrf.mxu0
        %v2422 = vadd.f32 %v2333, %v2421
        %2423 = vmatmul.bf16.gmra.mxu0 %v936
        %v2424 = vpop.f32.mrf.mxu0
        %v2425 = vadd.f32 %v2336, %v2424
        %v2426 = vpop.f32.mrf.mxu0
        %v2427 = vadd.f32 %v2338, %v2426
        %2428 = vmatmul.bf16.gmra.mxu0 %v937
        %v2429 = vpop.f32.mrf.mxu0
        %v2430 = vadd.f32 %v2341, %v2429
        %v2431 = vpop.f32.mrf.mxu0
        %v2432 = vadd.f32 %v2343, %v2431
        %2433 = vmatmul.bf16.gmra.mxu0 %v938
        %v2434 = vpop.f32.mrf.mxu0
        %v2435 = vadd.f32 %v2346, %v2434
        %v2436 = vpop.f32.mrf.mxu0
        %v2437 = vadd.f32 %v2348, %v2436
        %2438 = vmatmul.bf16.gmra.mxu0 %v939
        %v2439 = vpop.f32.mrf.mxu0
        %v2440 = vadd.f32 %v2351, %v2439
        %v2441 = vpop.f32.mrf.mxu0
        %v2442 = vadd.f32 %v2353, %v2441
        %2443 = vmatmul.bf16.gmra.mxu0 %v940
        %v2444 = vpop.f32.mrf.mxu0
        %v2445 = vadd.f32 %v2356, %v2444
        %v2446 = vpop.f32.mrf.mxu0
        %v2447 = vadd.f32 %v2358, %v2446
        %2448 = vmatmul.bf16.gmra.mxu0 %v941
        %v2449 = vpop.f32.mrf.mxu0
        %v2450 = vadd.f32 %v2361, %v2449
        %v2451 = vpop.f32.mrf.mxu0
        %v2452 = vadd.f32 %v2363, %v2451
        %2453 = vmatmul.bf16.gmra.mxu0 %v942
        %v2454 = vpop.f32.mrf.mxu0
        %v2455 = vadd.f32 %v2366, %v2454
        %v2456 = vpop.f32.mrf.mxu0
        %v2457 = vadd.f32 %v2368, %v2456
        %2458 = vmatmul.bf16.gmra.mxu0 %v943
        %v2459 = vpop.f32.mrf.mxu0
        %v2460 = vadd.f32 %v2371, %v2459
        %v2461 = vpop.f32.mrf.mxu0
        %v2462 = vadd.f32 %v2373, %v2461
        %2463 = vmatmul.bf16.gmra.mxu0 %v944
        %v2464 = vpop.f32.mrf.mxu0
        %v2465 = vadd.f32 %v2376, %v2464
        %v2466 = vpop.f32.mrf.mxu0
        %v2467 = vadd.f32 %v2378, %v2466
        %2468 = vmatmul.bf16.gmra.mxu0 %v945
        %v2469 = vpop.f32.mrf.mxu0
        %v2470 = vadd.f32 %v2381, %v2469
        %v2471 = vpop.f32.mrf.mxu0
        %v2472 = vadd.f32 %v2383, %v2471
        %2473 = vmatmul.bf16.gmra.mxu0 %v946
        %v2474 = vpop.f32.mrf.mxu0
        %v2475 = vadd.f32 %v2386, %v2474
        %v2476 = vpop.f32.mrf.mxu0
        %v2477 = vadd.f32 %v2388, %v2476
        %2478 = vmatmul.bf16.gmra.mxu0 %v947
        %v2479 = vpop.f32.mrf.mxu0
        %v2480 = vadd.f32 %v2391, %v2479
        %v2481 = vpop.f32.mrf.mxu0
        %v2482 = vadd.f32 %v2393, %v2481
        %2483 = vmatmul.bf16.gmra.mxu0 %v931
        %v2484 = vpop.f32.mrf.mxu0
        %v2485 = vadd.f32 %v2396, %v2484
        %v2486 = vpop.f32.mrf.mxu0
        %v2487 = vadd.f32 %v2398, %v2486
        %2488 = vdwg.mxu0
        %2489 = vmatpush.bf16.msra.mxu0 %v1785
        %2490 = vmatpush.bf16.msra.mxu0 %v1784
        %2491 = vmatpush.bf16.msra.mxu0 %v1783
        %2492 = vmatpush.bf16.msra.mxu0 %v1782
        %2493 = vmatpush.bf16.msra.mxu0 %v1781
        %2494 = vmatpush.bf16.msra.mxu0 %v1780
        %2495 = vmatpush.bf16.msra.mxu0 %v1779
        %2496 = vmatpush.bf16.msra.mxu0 %v1778
        %2497 = vmatmul.bf16.gmra.mxu0 %v1001
        %v2498 = vpop.f32.mrf.mxu0
        %v2499 = vadd.f32 %v2410, %v2498
        %v2500 = vpop.f32.mrf.mxu0
        %v2501 = vadd.f32 %v2412, %v2500
        %2502 = vmatmul.bf16.gmra.mxu0 %v1013
        %v2503 = vpop.f32.mrf.mxu0
        %v2504 = vadd.f32 %v2415, %v2503
        %v2505 = vpop.f32.mrf.mxu0
        %v2506 = vadd.f32 %v2417, %v2505
        %2507 = vmatmul.bf16.gmra.mxu0 %v1025
        %v2508 = vpop.f32.mrf.mxu0
        %v2509 = vadd.f32 %v2420, %v2508
        %v2510 = vpop.f32.mrf.mxu0
        %v2511 = vadd.f32 %v2422, %v2510
        %2512 = vmatmul.bf16.gmra.mxu0 %v1037
        %v2513 = vpop.f32.mrf.mxu0
        %v2514 = vadd.f32 %v2425, %v2513
        %v2515 = vpop.f32.mrf.mxu0
        %v2516 = vadd.f32 %v2427, %v2515
        %2517 = vmatmul.bf16.gmra.mxu0 %v1049
        %v2518 = vpop.f32.mrf.mxu0
        %v2519 = vadd.f32 %v2430, %v2518
        %v2520 = vpop.f32.mrf.mxu0
        %v2521 = vadd.f32 %v2432, %v2520
        %2522 = vmatmul.bf16.gmra.mxu0 %v1061
        %v2523 = vpop.f32.mrf.mxu0
        %v2524 = vadd.f32 %v2435, %v2523
        %v2525 = vpop.f32.mrf.mxu0
        %v2526 = vadd.f32 %v2437, %v2525
        %2527 = vmatmul.bf16.gmra.mxu0 %v1073
        %v2528 = vpop.f32.mrf.mxu0
        %v2529 = vadd.f32 %v2440, %v2528
        %v2530 = vpop.f32.mrf.mxu0
        %v2531 = vadd.f32 %v2442, %v2530
        %2532 = vmatmul.bf16.gmra.mxu0 %v1085
        %v2533 = vpop.f32.mrf.mxu0
        %v2534 = vadd.f32 %v2445, %v2533
        %v2535 = vpop.f32.mrf.mxu0
        %v2536 = vadd.f32 %v2447, %v2535
        %2537 = vmatmul.bf16.gmra.mxu0 %v1097
        %v2538 = vpop.f32.mrf.mxu0
        %v2539 = vadd.f32 %v2450, %v2538
        %v2540 = vpop.f32.mrf.mxu0
        %v2541 = vadd.f32 %v2452, %v2540
        %2542 = vmatmul.bf16.gmra.mxu0 %v1109
        %v2543 = vpop.f32.mrf.mxu0
        %v2544 = vadd.f32 %v2455, %v2543
        %v2545 = vpop.f32.mrf.mxu0
        %v2546 = vadd.f32 %v2457, %v2545
        %2547 = vmatmul.bf16.gmra.mxu0 %v1121
        %v2548 = vpop.f32.mrf.mxu0
        %v2549 = vadd.f32 %v2460, %v2548
        %v2550 = vpop.f32.mrf.mxu0
        %v2551 = vadd.f32 %v2462, %v2550
        %2552 = vmatmul.bf16.gmra.mxu0 %v1133
        %v2553 = vpop.f32.mrf.mxu0
        %v2554 = vadd.f32 %v2465, %v2553
        %v2555 = vpop.f32.mrf.mxu0
        %v2556 = vadd.f32 %v2467, %v2555
        %2557 = vmatmul.bf16.gmra.mxu0 %v1145
        %v2558 = vpop.f32.mrf.mxu0
        %v2559 = vadd.f32 %v2470, %v2558
        %v2560 = vpop.f32.mrf.mxu0
        %v2561 = vadd.f32 %v2472, %v2560
        %2562 = vmatmul.bf16.gmra.mxu0 %v1157
        %v2563 = vpop.f32.mrf.mxu0
        %v2564 = vadd.f32 %v2475, %v2563
        %v2565 = vpop.f32.mrf.mxu0
        %v2566 = vadd.f32 %v2477, %v2565
        %2567 = vmatmul.bf16.gmra.mxu0 %v1282
        %v2568 = vpop.f32.mrf.mxu0
        %v2569 = vadd.f32 %v2480, %v2568
        %v2570 = vpop.f32.mrf.mxu0
        %v2571 = vadd.f32 %v2482, %v2570
        %2572 = vmatmul.bf16.gmra.mxu0 %v977
        %v2573 = vpop.f32.mrf.mxu0
        %v2574 = vadd.f32 %v2485, %v2573
        %v2575 = vpop.f32.mrf.mxu0
        %v2576 = vadd.f32 %v2487, %v2575
        %2577 = vdwg.mxu0
        %2578 = vmatpush.bf16.msra.mxu0 %v1793
        %2579 = vmatpush.bf16.msra.mxu0 %v1792
        %2580 = vmatpush.bf16.msra.mxu0 %v1791
        %2581 = vmatpush.bf16.msra.mxu0 %v1790
        %2582 = vmatpush.bf16.msra.mxu0 %v1789
        %2583 = vmatpush.bf16.msra.mxu0 %v1788
        %2584 = vmatpush.bf16.msra.mxu0 %v1787
        %2585 = vmatpush.bf16.msra.mxu0 %v1786
        %2586 = vmatmul.bf16.gmra.mxu0 %v1215
        %v2587 = vpop.f32.mrf.mxu0
        %v2588 = vadd.f32 %v2499, %v2587
        %v2589 = vpop.f32.mrf.mxu0
        %v2590 = vadd.f32 %v2501, %v2589
        %2591 = vmatmul.bf16.gmra.mxu0 %v1218
        %v2592 = vpop.f32.mrf.mxu0
        %v2593 = vadd.f32 %v2504, %v2592
        %v2594 = vpop.f32.mrf.mxu0
        %v2595 = vadd.f32 %v2506, %v2594
        %2596 = vmatmul.bf16.gmra.mxu0 %v1221
        %v2597 = vpop.f32.mrf.mxu0
        %v2598 = vadd.f32 %v2509, %v2597
        %v2599 = vpop.f32.mrf.mxu0
        %v2600 = vadd.f32 %v2511, %v2599
        %2601 = vmatmul.bf16.gmra.mxu0 %v1224
        %v2602 = vpop.f32.mrf.mxu0
        %v2603 = vadd.f32 %v2514, %v2602
        %v2604 = vpop.f32.mrf.mxu0
        %v2605 = vadd.f32 %v2516, %v2604
        %2606 = vmatmul.bf16.gmra.mxu0 %v1227
        %v2607 = vpop.f32.mrf.mxu0
        %v2608 = vadd.f32 %v2519, %v2607
        %v2609 = vpop.f32.mrf.mxu0
        %v2610 = vadd.f32 %v2521, %v2609
        %2611 = vmatmul.bf16.gmra.mxu0 %v1230
        %v2612 = vpop.f32.mrf.mxu0
        %v2613 = vadd.f32 %v2524, %v2612
        %v2614 = vpop.f32.mrf.mxu0
        %v2615 = vadd.f32 %v2526, %v2614
        %2616 = vmatmul.bf16.gmra.mxu0 %v1233
        %v2617 = vpop.f32.mrf.mxu0
        %v2618 = vadd.f32 %v2529, %v2617
        %v2619 = vpop.f32.mrf.mxu0
        %v2620 = vadd.f32 %v2531, %v2619
        %2621 = vmatmul.bf16.gmra.mxu0 %v1236
        %v2622 = vpop.f32.mrf.mxu0
        %v2623 = vadd.f32 %v2534, %v2622
        %v2624 = vpop.f32.mrf.mxu0
        %v2625 = vadd.f32 %v2536, %v2624
        %2626 = vmatmul.bf16.gmra.mxu0 %v1239
        %v2627 = vpop.f32.mrf.mxu0
        %v2628 = vadd.f32 %v2539, %v2627
        %v2629 = vpop.f32.mrf.mxu0
        %v2630 = vadd.f32 %v2541, %v2629
        %2631 = vmatmul.bf16.gmra.mxu0 %v1242
        %v2632 = vpop.f32.mrf.mxu0
        %v2633 = vadd.f32 %v2544, %v2632
        %v2634 = vpop.f32.mrf.mxu0
        %v2635 = vadd.f32 %v2546, %v2634
        %2636 = vmatmul.bf16.gmra.mxu0 %v1245
        %v2637 = vpop.f32.mrf.mxu0
        %v2638 = vadd.f32 %v2549, %v2637
        %v2639 = vpop.f32.mrf.mxu0
        %v2640 = vadd.f32 %v2551, %v2639
        %2641 = vmatmul.bf16.gmra.mxu0 %v1248
        %v2642 = vpop.f32.mrf.mxu0
        %v2643 = vadd.f32 %v2554, %v2642
        %v2644 = vpop.f32.mrf.mxu0
        %v2645 = vadd.f32 %v2556, %v2644
        %2646 = vmatmul.bf16.gmra.mxu0 %v1251
        %v2647 = vpop.f32.mrf.mxu0
        %v2648 = vadd.f32 %v2559, %v2647
        %v2649 = vpop.f32.mrf.mxu0
        %v2650 = vadd.f32 %v2561, %v2649
        %2651 = vmatmul.bf16.gmra.mxu0 %v1254
        %v2652 = vpop.f32.mrf.mxu0
        %v2653 = vadd.f32 %v2564, %v2652
        %v2654 = vpop.f32.mrf.mxu0
        %v2655 = vadd.f32 %v2566, %v2654
        %2656 = vmatmul.bf16.gmra.mxu0 %v1288
        %v2657 = vpop.f32.mrf.mxu0
        %v2658 = vadd.f32 %v2569, %v2657
        %v2659 = vpop.f32.mrf.mxu0
        %v2660 = vadd.f32 %v2571, %v2659
        %2661 = vmatmul.bf16.gmra.mxu0 %v1209
        %v2662 = vpop.f32.mrf.mxu0
        %v2663 = vadd.f32 %v2574, %v2662
        %v2664 = vpop.f32.mrf.mxu0
        %v2665 = vadd.f32 %v2576, %v2664
        %2666 = vdwg.mxu0
        %v2667 = vld [vmem:[%s5] sm:$0x1]
        %v2669 = vperm.slane %v2667, 0
        %v2671 = vmul.f32 %v2588, %v2669
        %v2672 = vmul.f32 %v2590, %v2669
        %v2673 = vmul.f32 %v2593, %v2669
        %v2674 = vmul.f32 %v2595, %v2669
        %v2675 = vmul.f32 %v2598, %v2669
        %v2676 = vmul.f32 %v2600, %v2669
        %v2677 = vmul.f32 %v2603, %v2669
        %v2678 = vmul.f32 %v2605, %v2669
        %v2679 = vmul.f32 %v2608, %v2669
        %v2680 = vmul.f32 %v2610, %v2669
        %v2681 = vmul.f32 %v2613, %v2669
        %v2682 = vmul.f32 %v2615, %v2669
        %v2683 = vmul.f32 %v2618, %v2669
        %v2684 = vmul.f32 %v2620, %v2669
        %v2685 = vmul.f32 %v2623, %v2669
        %v2686 = vmul.f32 %v2625, %v2669
        %v2687 = vmul.f32 %v2628, %v2669
        %v2688 = vmul.f32 %v2630, %v2669
        %v2689 = vmul.f32 %v2633, %v2669
        %v2690 = vmul.f32 %v2635, %v2669
        %v2691 = vmul.f32 %v2638, %v2669
        %v2692 = vmul.f32 %v2640, %v2669
        %v2693 = vmul.f32 %v2643, %v2669
        %v2694 = vmul.f32 %v2645, %v2669
        %v2695 = vmul.f32 %v2648, %v2669
        %v2696 = vmul.f32 %v2650, %v2669
        %v2697 = vmul.f32 %v2653, %v2669
        %v2698 = vmul.f32 %v2655, %v2669
        %v2699 = vmul.f32 %v2658, %v2669
        %v2700 = vmul.f32 %v2660, %v2669
        %v2701 = vmul.f32 %v2663, %v2669
        %v2702 = vmul.f32 %v2665, %v2669
        %v2703 = vld [vmem:[%s6] sm:$0x1]
        %v2705 = vperm.slane %v2703, 0
        %v2707 = vadd.f32 %v2671, %v2705
        %v2708 = vadd.f32 %v2672, %v2705
        %v2709 = vadd.f32 %v2673, %v2705
        %v2710 = vadd.f32 %v2674, %v2705
        %v2711 = vadd.f32 %v2675, %v2705
        %v2712 = vadd.f32 %v2676, %v2705
        %v2713 = vadd.f32 %v2677, %v2705
        %v2714 = vadd.f32 %v2678, %v2705
        %v2715 = vadd.f32 %v2679, %v2705
        %v2716 = vadd.f32 %v2680, %v2705
        %v2717 = vadd.f32 %v2681, %v2705
        %v2718 = vadd.f32 %v2682, %v2705
        %v2719 = vadd.f32 %v2683, %v2705
        %v2720 = vadd.f32 %v2684, %v2705
        %v2721 = vadd.f32 %v2685, %v2705
        %v2722 = vadd.f32 %v2686, %v2705
        %v2723 = vadd.f32 %v2687, %v2705
        %v2724 = vadd.f32 %v2688, %v2705
        %v2725 = vadd.f32 %v2689, %v2705
        %v2726 = vadd.f32 %v2690, %v2705
        %v2727 = vadd.f32 %v2691, %v2705
        %v2728 = vadd.f32 %v2692, %v2705
        %v2729 = vadd.f32 %v2693, %v2705
        %v2730 = vadd.f32 %v2694, %v2705
        %v2731 = vadd.f32 %v2695, %v2705
        %v2732 = vadd.f32 %v2696, %v2705
        %v2733 = vadd.f32 %v2697, %v2705
        %v2734 = vadd.f32 %v2698, %v2705
        %v2735 = vadd.f32 %v2699, %v2705
        %v2736 = vadd.f32 %v2700, %v2705
        %v2737 = vadd.f32 %v2701, %v2705
        %v2738 = vadd.f32 %v2702, %v2705
        %v2739 = vmax.f32 %v2707, 0.0
        %v2740 = vmax.f32 %v2708, 0.0
        %v2741 = vmax.f32 %v2709, 0.0
        %v2742 = vmax.f32 %v2710, 0.0
        %v2743 = vmax.f32 %v2711, 0.0
        %v2744 = vmax.f32 %v2712, 0.0
        %v2745 = vmax.f32 %v2713, 0.0
        %v2746 = vmax.f32 %v2714, 0.0
        %v2747 = vmax.f32 %v2715, 0.0
        %v2748 = vmax.f32 %v2716, 0.0
        %v2749 = vmax.f32 %v2717, 0.0
        %v2750 = vmax.f32 %v2718, 0.0
        %v2751 = vmax.f32 %v2719, 0.0
        %v2752 = vmax.f32 %v2720, 0.0
        %v2753 = vmax.f32 %v2721, 0.0
        %v2754 = vmax.f32 %v2722, 0.0
        %v2755 = vmax.f32 %v2723, 0.0
        %v2756 = vmax.f32 %v2724, 0.0
        %v2757 = vmax.f32 %v2725, 0.0
        %v2758 = vmax.f32 %v2726, 0.0
        %v2759 = vmax.f32 %v2727, 0.0
        %v2760 = vmax.f32 %v2728, 0.0
        %v2761 = vmax.f32 %v2729, 0.0
        %v2762 = vmax.f32 %v2730, 0.0
        %v2763 = vmax.f32 %v2731, 0.0
        %v2764 = vmax.f32 %v2732, 0.0
        %v2765 = vmax.f32 %v2733, 0.0
        %v2766 = vmax.f32 %v2734, 0.0
        %v2767 = vmax.f32 %v2735, 0.0
        %v2768 = vmax.f32 %v2736, 0.0
        %v2769 = vmax.f32 %v2737, 0.0
        %v2770 = vmax.f32 %v2738, 0.0
        %2771 = vst [vmem:[%s271] sm:$0xff] %v2739
        %2772 = vst [vmem:[%s271 + $0x8] sm:$0xff] %v2740
        %2773 = vst [vmem:[%s271 + $0x10] sm:$0xff] %v2741
        %2774 = vst [vmem:[%s271 + $0x18] sm:$0xff] %v2742
        %2775 = vst [vmem:[%s271 + $0x20] sm:$0xff] %v2743
        %2776 = vst [vmem:[%s271 + $0x28] sm:$0xff] %v2744
        %2777 = vst [vmem:[%s271 + $0x30] sm:$0xff] %v2745
        %2778 = vst [vmem:[%s271 + $0x38] sm:$0xff] %v2746
        %2779 = vst [vmem:[%s271 + $0x40] sm:$0xff] %v2747
        %2780 = vst [vmem:[%s271 + $0x48] sm:$0xff] %v2748
        %2781 = vst [vmem:[%s271 + $0x50] sm:$0xff] %v2749
        %2782 = vst [vmem:[%s271 + $0x58] sm:$0xff] %v2750
        %2783 = vst [vmem:[%s271 + $0x60] sm:$0xff] %v2751
        %2784 = vst [vmem:[%s271 + $0x68] sm:$0xff] %v2752
        %2785 = vst [vmem:[%s271 + $0x70] sm:$0xff] %v2753
        %2786 = vst [vmem:[%s271 + $0x78] sm:$0xff] %v2754
        %2787 = vst [vmem:[%s271 + $0x80] sm:$0xff] %v2755
        %2788 = vst [vmem:[%s271 + $0x88] sm:$0xff] %v2756
        %2789 = vst [vmem:[%s271 + $0x90] sm:$0xff] %v2757
        %2790 = vst [vmem:[%s271 + $0x98] sm:$0xff] %v2758
        %2791 = vst [vmem:[%s271 + $0xa0] sm:$0xff] %v2759
        %2792 = vst [vmem:[%s271 + $0xa8] sm:$0xff] %v2760
        %2793 = vst [vmem:[%s271 + $0xb0] sm:$0xff] %v2761
        %2794 = vst [vmem:[%s271 + $0xb8] sm:$0xff] %v2762
        %2795 = vst [vmem:[%s271 + $0xc0] sm:$0xff] %v2763
        %2796 = vst [vmem:[%s271 + $0xc8] sm:$0xff] %v2764
        %2797 = vst [vmem:[%s271 + $0xd0] sm:$0xff] %v2765
        %2798 = vst [vmem:[%s271 + $0xd8] sm:$0xff] %v2766
        %2799 = vst [vmem:[%s271 + $0xe0] sm:$0xff] %v2767
        %2800 = vst [vmem:[%s271 + $0xe8] sm:$0xff] %v2768
        %2801 = vst [vmem:[%s271 + $0xf0] sm:$0xff] %v2769
        %2802 = vst [vmem:[%s271 + $0xf8] sm:$0xff] %v2770
        %s2803 = sand.u32 %s181, 1
        %s2804 = scalar_lea.sflag [#allocation3], %s2803
        %s2805 = sand.u32 %s181, 1
        %s2806 = smul.addr %s2805, 256
        %s2807 = scalar_lea.vmem [#allocation2], %s2806
        // Predicated region
        $region49: #{double_conv_pallas.1} parent=47 // pred_check
          %p2808 = pneg %p191
        $region50: #{double_conv_pallas.1} parent=47 // pred_check_branch
          %2810 = sbr.rel (%p2808) target = $region52
        $region51: #{double_conv_pallas.1} parent=47 // pred_region
          %2812 = vsyncadd %s2804, 0
          %s2813 = smul.addr %s21, 32
          %s2814 = smul.addr %s2813, 8
          %s2815 = scalar_lea.hbm %s7, %s2814
          %s2816 = sshll.u32 %s2807, 4
          %s2817 = int_to_ptr.vmem [resolvable:$true] %s2816
          %s2818 = sshll.u32 %s2815, 4
          %s2819 = int_to_ptr.hbm [resolvable:$true] %s2818
          %2824 = dma.vmem_to_hbm [thread:$0]  %s2817, 4096, %s2819, %s2804, 128, 128, 8
        $region52: #{double_conv_pallas.1} parent=47 // pred_fallthru
          _
      $region48: #{double_conv_pallas.1} parent=5 // pred_fallthru
        _
      %p2825 = scmp.le.s32.totalorder 2, %s16
      // Predicated region
      $region53: #{double_conv_pallas.1} parent=5 // pred_check
        %p2826 = pneg %p2825
      $region54: #{double_conv_pallas.1} parent=5 // pred_check_branch
        %2828 = sbr.rel (%p2826) target = $region56
      $region55: #{double_conv_pallas.1} parent=5 // pred_region
        %s2829 = ssub.s32 %s16, 2
        // Predicated region
        $region57: #{double_conv_pallas.1} parent=55 // pred_check
          %p2830 = pneg %p197
        $region58: #{double_conv_pallas.1} parent=55 // pred_check_branch
          %2832 = sbr.rel (%p2830) target = $region60
        $region59: #{double_conv_pallas.1} parent=55 // pred_region
          %s2833 = sand.u32 %s182, 1
          %s2834 = scalar_lea.sflag [#allocation3], %s2833
          %s2835 = sand.u32 %s182, 1
          %s2836 = smul.addr %s2835, 256
          %s2837 = scalar_lea.vmem [#allocation2], %s2836
          %2839 = dma.done %s2834, 4096
        $region60: #{double_conv_pallas.1} parent=55 // pred_fallthru
          _
      $region56: #{double_conv_pallas.1} parent=5 // pred_fallthru
        _
    $region6: #{double_conv_pallas.1} parent=1 // loop_footer
      %s20 = sadd.s32 1, %s16
    $region7: #{double_conv_pallas.1} parent=1 // loop_footer_branch
      %15 = sbr.rel target = $region3
    $region8: #{double_conv_pallas.1} parent=1 // loop_exit
      _
    %2840 = vsyncpa [#allocation3], 1
    %s2841 = scalar_lea.sflag [#allocation3], 1
    %2842 = vsyncpa %s2841, 1

</llo_original>
